<compile_context>
chip_gen: v7x
topology: tpu7x:2x2x1
jax: 0.10.0
libtpu: 0.0.40
codegen_flags: <defaults>
</compile_context>

<pallas_src>
import jax
import jax.numpy as jnp
from jax import lax
from jax.experimental import pallas as pl
from jax.experimental.pallas import tpu as pltpu


def _attention_kernel(x_ref, wqkv_ref, wproj_ref, bias_ref, attn_ref, y_ref):
    # x_ref:    (1, N, C)   current batch element's tokens
    # wqkv_ref: (C, 3C)     fused qkv weight, (in, out) layout; output columns
    #                       ordered [q | k | v], head-major inside each section,
    #                       softmax scale pre-folded into the q columns
    # wproj_ref:(C, C)      w_proj.T, (in, out) layout
    # bias_ref: (1, C)      proj bias
    # attn_ref: (1, H, N, N) softmaxed attention maps
    # y_ref:    (1, N, C)    final projected output
    _, H, N, _ = attn_ref.shape
    C = x_ref.shape[-1]
    Dh = C // H

    x = x_ref[0]                                                   # (N, C)

    # One wide MXU matmul producing q|k|v for all heads at once.
    qkv = jnp.dot(x, wqkv_ref[...],
                  preferred_element_type=jnp.float32)              # (N, 3C)

    ctxs = []
    for h in range(H):                                             # static unroll
        q = qkv[:, h * Dh:(h + 1) * Dh]                            # pre-scaled
        k = qkv[:, C + h * Dh:C + (h + 1) * Dh]
        v = qkv[:, 2 * C + h * Dh:2 * C + (h + 1) * Dh]

        # q @ k^T without materialising a transpose (contract last dims).
        scores = lax.dot_general(q, k, (((1,), (1,)), ((), ())),
                                 preferred_element_type=jnp.float32)  # (N, N)

        # Numerically stable softmax over the key axis.
        m = jnp.max(scores, axis=-1, keepdims=True)
        e = jnp.exp(scores - m)
        s = jnp.sum(e, axis=-1, keepdims=True)
        attn = e * pl.reciprocal(s, approx=False)
        attn_ref[0, h] = attn.astype(attn_ref.dtype)

        ctxs.append(jnp.dot(attn, v,
                            preferred_element_type=jnp.float32))   # (N, Dh)

    # Head-major concat matches torch's (B,N,H,Dh)->(B,N,C) merge.
    ctx = jnp.concatenate(ctxs, axis=-1)                           # (N, C)

    # Single wide output projection + bias.
    y = jnp.dot(ctx, wproj_ref[...], preferred_element_type=jnp.float32)
    y_ref[0] = (y + bias_ref[...]).astype(y_ref.dtype)


def prepare_attention_weights(w_qkv, w_proj, b_proj, num_heads):
    """One-time host-side weight prep.  Call at model init, NOT per forward."""
    C = w_qkv.shape[1]
    Dh = C // num_heads
    scale = Dh ** (-0.5)
    # torch qkv weight is (3C, C), rows ordered [q | k | v], head-major.
    # Transpose to (in, out) and fold the softmax scale into the q columns.
    w_fused = jnp.swapaxes(w_qkv, 0, 1)                            # (C, 3C)
    w_fused = w_fused.at[:, :C].multiply(scale)
    w_proj_t = jnp.swapaxes(w_proj, 0, 1)                          # (C, C)
    bias = b_proj.reshape(1, C)
    return w_fused, w_proj_t, bias


def attention_forward(x, w_fused, w_proj_t, bias, num_heads):
    """x: (B, N, C); weights from prepare_attention_weights()."""
    B, N, C = x.shape
    H = num_heads

    attn, y = pl.pallas_call(
        _attention_kernel,
        out_shape=(
            jax.ShapeDtypeStruct((B, H, N, N), x.dtype),
            jax.ShapeDtypeStruct((B, N, C), x.dtype),
        ),
        grid=(B,),
        in_specs=[
            pl.BlockSpec((1, N, C), lambda b: (b, 0, 0)),        # x per batch
            pl.BlockSpec((C, 3 * C), lambda b: (0, 0)),          # fused qkv W (resident)
            pl.BlockSpec((C, C), lambda b: (0, 0)),              # proj W (resident)
            pl.BlockSpec((1, C), lambda b: (0, 0)),              # proj bias (resident)
        ],
        out_specs=(
            pl.BlockSpec((1, H, N, N), lambda b: (b, 0, 0, 0)),
            pl.BlockSpec((1, N, C), lambda b: (b, 0, 0)),
        ),
        compiler_params=pltpu.CompilerParams(
            dimension_semantics=("parallel",)),
    )(x, w_fused, w_proj_t, bias)

    return y, attn


def _reference(x, w_qkv, w_proj, b_proj, num_heads):
    """Pure-JAX replica of the PyTorch forward (mask=None, dropout p=0)."""
    B, N, C = x.shape
    H = num_heads
    Dh = C // H
    scale = Dh ** (-0.5)
    qkv = x @ w_qkv.T                                              # (B, N, 3C)
    qkv = qkv.reshape(B, N, 3, H, Dh).transpose(2, 0, 3, 1, 4)
    q, k, v = qkv[0], qkv[1], qkv[2]                               # (B, H, N, Dh)
    attn = jnp.einsum("bhnd,bhmd->bhnm", q, k) * scale
    attn = jax.nn.softmax(attn, axis=-1)
    out = jnp.einsum("bhnm,bhmd->bhnd", attn, v)
    out = out.transpose(0, 2, 1, 3).reshape(B, N, C)
    y = out @ w_proj.T + b_proj
    return y, attn


if __name__ == "__main__":
    B, N, C, H = 2, 16, 64, 4   # tiny demo; real ViT shapes are overhead-free

    key = jax.random.PRNGKey(0)
    kx, kqkv, kproj, kb = jax.random.split(key, 4)
    x = jax.random.normal(kx, (B, N, C), dtype=jnp.float32)
    w_qkv = jax.random.normal(kqkv, (3 * C, C), dtype=jnp.float32) * 0.05
    w_proj = jax.random.normal(kproj, (C, C), dtype=jnp.float32) * 0.05
    b_proj = jax.random.normal(kb, (C,), dtype=jnp.float32) * 0.05

    # Hoisted one-time weight prep (model-init time in a real deployment).
    w_fused, w_proj_t, bias = prepare_attention_weights(w_qkv, w_proj, b_proj, H)

    y, attn = attention_forward(x, w_fused, w_proj_t, bias, H)
    y = jax.block_until_ready(y)
    attn = jax.block_until_ready(attn)

    y_ref, attn_ref = _reference(x, w_qkv, w_proj, b_proj, H)
    assert y.shape == (B, N, C) and attn.shape == (B, H, N, N)
    assert jnp.allclose(attn, attn_ref, atol=2e-4, rtol=2e-4)
    assert jnp.allclose(y, y_ref, atol=2e-4, rtol=2e-4)

    print("KERNEL_OK")
</pallas_src>

<mosaic_0001>
module attributes {stable_mosaic.version = 11 : i64} {
  func.func @_attention_kernel(%arg0: i32, %arg1: memref<1x16x64xf32, #tpu.memory_space<vmem>>, %arg2: memref<64x192xf32, #tpu.memory_space<vmem>>, %arg3: memref<64x64xf32, #tpu.memory_space<vmem>>, %arg4: memref<1x64xf32, #tpu.memory_space<vmem>>, %arg5: memref<1x4x16x16xf32, #tpu.memory_space<vmem>>, %arg6: memref<1x16x64xf32, #tpu.memory_space<vmem>>) attributes {dimension_semantics = [#tpu.dimension_semantics<parallel>], iteration_bounds = array<i64: 2>, scalar_prefetch = 0 : i64, scratch_operands = 0 : i64, tpu.core_type = #tpu.core_type<tc>, window_params = [{transform_indices = @transform_0, window_bounds = array<i64: 1, 16, 64>}, {pipeline_mode = #tpu.pipeline_mode<synchronous>, transform_indices = @transform_1, window_bounds = array<i64: 64, 192>}, {pipeline_mode = #tpu.pipeline_mode<synchronous>, transform_indices = @transform_2, window_bounds = array<i64: 64, 64>}, {pipeline_mode = #tpu.pipeline_mode<synchronous>, transform_indices = @transform_3, window_bounds = array<i64: 1, 64>}, {transform_indices = @transform_4, window_bounds = array<i64: 1, 4, 16, 16>}, {transform_indices = @transform_5, window_bounds = array<i64: 1, 16, 64>}]} {
    %c0 = arith.constant 0 : index
    %c0_0 = arith.constant 0 : index
    %c0_1 = arith.constant 0 : index
    %0 = vector.load %arg1[%c0, %c0_0, %c0_1] : memref<1x16x64xf32, #tpu.memory_space<vmem>>, vector<1x16x64xf32>
    %1 = vector.shape_cast %0 : vector<1x16x64xf32> to vector<16x64xf32>
    %c0_2 = arith.constant 0 : index
    %c0_3 = arith.constant 0 : index
    %2 = vector.load %arg2[%c0_2, %c0_3] : memref<64x192xf32, #tpu.memory_space<vmem>>, vector<64x192xf32>
    %cst = arith.constant dense<0.000000e+00> : vector<16x192xf32>
    %3 = tpu.matmul %1, %2, %cst {dimension_numbers = #tpu.dot_dimension_numbers<[1], [0], [0], [1], [0, 0, 1, 1], [], []>} : vector<16x64xf32>, vector<64x192xf32>, vector<16x192xf32> -> vector<16x192xf32>
    %4 = vector.extract_strided_slice %3 {offsets = [0, 0], sizes = [16, 16], strides = [1, 1]} : vector<16x192xf32> to vector<16x16xf32>
    %5 = vector.extract_strided_slice %3 {offsets = [0, 64], sizes = [16, 16], strides = [1, 1]} : vector<16x192xf32> to vector<16x16xf32>
    %6 = vector.extract_strided_slice %3 {offsets = [0, 128], sizes = [16, 16], strides = [1, 1]} : vector<16x192xf32> to vector<16x16xf32>
    %cst_4 = arith.constant dense<0.000000e+00> : vector<16x16xf32>
    %7 = tpu.matmul %4, %5, %cst_4 {dimension_numbers = #tpu.dot_dimension_numbers<[1], [1], [0], [0], [0, 0, 1, 0], [], []>} : vector<16x16xf32>, vector<16x16xf32>, vector<16x16xf32> -> vector<16x16xf32>
    %cst_5 = arith.constant dense<0xFF800000> : vector<16xf32>
    %8 = vector.multi_reduction <maximumf>, %7, %cst_5 [1] : vector<16x16xf32> to vector<16xf32>
    %9 = vector.shape_cast %8 : vector<16xf32> to vector<16x1xf32>
    %10 = vector.broadcast %9 : vector<16x1xf32> to vector<16x16xf32>
    %11 = arith.subf %7, %10 : vector<16x16xf32>
    %12 = math.exp %11 : vector<16x16xf32>
    %cst_6 = arith.constant dense<0.000000e+00> : vector<16xf32>
    %13 = vector.multi_reduction <add>, %12, %cst_6 [1] : vector<16x16xf32> to vector<16xf32>
    %14 = vector.shape_cast %13 : vector<16xf32> to vector<16x1xf32>
    %15 = tpu.reciprocal %14 : vector<16x1xf32> -> vector<16x1xf32>
    %16 = vector.broadcast %15 : vector<16x1xf32> to vector<16x16xf32>
    %17 = arith.mulf %12, %16 : vector<16x16xf32>
    %c0_7 = arith.constant 0 : index
    %c0_8 = arith.constant 0 : index
    %c0_9 = arith.constant 0 : index
    %c0_10 = arith.constant 0 : index
    %18 = vector.load %arg5[%c0_7, %c0_8, %c0_9, %c0_10] : memref<1x4x16x16xf32, #tpu.memory_space<vmem>>, vector<1x1x16x16xf32>
    %19 = vector.shape_cast %18 : vector<1x1x16x16xf32> to vector<16x16xf32>
    %20 = vector.shape_cast %17 : vector<16x16xf32> to vector<1x1x16x16xf32>
    tpu.vector_store %arg5[%c0_7, %c0_8, %c0_9, %c0_10], %20 {strides = array<i32>} : memref<1x4x16x16xf32, #tpu.memory_space<vmem>>, vector<1x1x16x16xf32>,
    %cst_11 = arith.constant dense<0.000000e+00> : vector<16x16xf32>
    %21 = tpu.matmul %17, %6, %cst_11 {dimension_numbers = #tpu.dot_dimension_numbers<[1], [0], [0], [1], [0, 0, 1, 1], [], []>} : vector<16x16xf32>, vector<16x16xf32>, vector<16x16xf32> -> vector<16x16xf32>
    %22 = vector.extract_strided_slice %3 {offsets = [0, 16], sizes = [16, 16], strides = [1, 1]} : vector<16x192xf32> to vector<16x16xf32>
    %23 = vector.extract_strided_slice %3 {offsets = [0, 80], sizes = [16, 16], strides = [1, 1]} : vector<16x192xf32> to vector<16x16xf32>
    %24 = vector.extract_strided_slice %3 {offsets = [0, 144], sizes = [16, 16], strides = [1, 1]} : vector<16x192xf32> to vector<16x16xf32>
    %cst_12 = arith.constant dense<0.000000e+00> : vector<16x16xf32>
    %25 = tpu.matmul %22, %23, %cst_12 {dimension_numbers = #tpu.dot_dimension_numbers<[1], [1], [0], [0], [0, 0, 1, 0], [], []>} : vector<16x16xf32>, vector<16x16xf32>, vector<16x16xf32> -> vector<16x16xf32>
    %cst_13 = arith.constant dense<0xFF800000> : vector<16xf32>
    %26 = vector.multi_reduction <maximumf>, %25, %cst_13 [1] : vector<16x16xf32> to vector<16xf32>
    %27 = vector.shape_cast %26 : vector<16xf32> to vector<16x1xf32>
    %28 = vector.broadcast %27 : vector<16x1xf32> to vector<16x16xf32>
    %29 = arith.subf %25, %28 : vector<16x16xf32>
    %30 = math.exp %29 : vector<16x16xf32>
    %cst_14 = arith.constant dense<0.000000e+00> : vector<16xf32>
    %31 = vector.multi_reduction <add>, %30, %cst_14 [1] : vector<16x16xf32> to vector<16xf32>
    %32 = vector.shape_cast %31 : vector<16xf32> to vector<16x1xf32>
    %33 = tpu.reciprocal %32 : vector<16x1xf32> -> vector<16x1xf32>
    %34 = vector.broadcast %33 : vector<16x1xf32> to vector<16x16xf32>
    %35 = arith.mulf %30, %34 : vector<16x16xf32>
    %c0_15 = arith.constant 0 : index
    %c1 = arith.constant 1 : index
    %c0_16 = arith.constant 0 : index
    %c0_17 = arith.constant 0 : index
    %36 = vector.load %arg5[%c0_15, %c1, %c0_16, %c0_17] : memref<1x4x16x16xf32, #tpu.memory_space<vmem>>, vector<1x1x16x16xf32>
    %37 = vector.shape_cast %36 : vector<1x1x16x16xf32> to vector<16x16xf32>
    %38 = vector.shape_cast %35 : vector<16x16xf32> to vector<1x1x16x16xf32>
    tpu.vector_store %arg5[%c0_15, %c1, %c0_16, %c0_17], %38 {strides = array<i32>} : memref<1x4x16x16xf32, #tpu.memory_space<vmem>>, vector<1x1x16x16xf32>,
    %cst_18 = arith.constant dense<0.000000e+00> : vector<16x16xf32>
    %39 = tpu.matmul %35, %24, %cst_18 {dimension_numbers = #tpu.dot_dimension_numbers<[1], [0], [0], [1], [0, 0, 1, 1], [], []>} : vector<16x16xf32>, vector<16x16xf32>, vector<16x16xf32> -> vector<16x16xf32>
    %40 = vector.extract_strided_slice %3 {offsets = [0, 32], sizes = [16, 16], strides = [1, 1]} : vector<16x192xf32> to vector<16x16xf32>
    %41 = vector.extract_strided_slice %3 {offsets = [0, 96], sizes = [16, 16], strides = [1, 1]} : vector<16x192xf32> to vector<16x16xf32>
    %42 = vector.extract_strided_slice %3 {offsets = [0, 160], sizes = [16, 16], strides = [1, 1]} : vector<16x192xf32> to vector<16x16xf32>
    %cst_19 = arith.constant dense<0.000000e+00> : vector<16x16xf32>
    %43 = tpu.matmul %40, %41, %cst_19 {dimension_numbers = #tpu.dot_dimension_numbers<[1], [1], [0], [0], [0, 0, 1, 0], [], []>} : vector<16x16xf32>, vector<16x16xf32>, vector<16x16xf32> -> vector<16x16xf32>
    %cst_20 = arith.constant dense<0xFF800000> : vector<16xf32>
    %44 = vector.multi_reduction <maximumf>, %43, %cst_20 [1] : vector<16x16xf32> to vector<16xf32>
    %45 = vector.shape_cast %44 : vector<16xf32> to vector<16x1xf32>
    %46 = vector.broadcast %45 : vector<16x1xf32> to vector<16x16xf32>
    %47 = arith.subf %43, %46 : vector<16x16xf32>
    %48 = math.exp %47 : vector<16x16xf32>
    %cst_21 = arith.constant dense<0.000000e+00> : vector<16xf32>
    %49 = vector.multi_reduction <add>, %48, %cst_21 [1] : vector<16x16xf32> to vector<16xf32>
    %50 = vector.shape_cast %49 : vector<16xf32> to vector<16x1xf32>
    %51 = tpu.reciprocal %50 : vector<16x1xf32> -> vector<16x1xf32>
    %52 = vector.broadcast %51 : vector<16x1xf32> to vector<16x16xf32>
    %53 = arith.mulf %48, %52 : vector<16x16xf32>
    %c0_22 = arith.constant 0 : index
    %c2 = arith.constant 2 : index
    %c0_23 = arith.constant 0 : index
    %c0_24 = arith.constant 0 : index
    %54 = vector.load %arg5[%c0_22, %c2, %c0_23, %c0_24] : memref<1x4x16x16xf32, #tpu.memory_space<vmem>>, vector<1x1x16x16xf32>
    %55 = vector.shape_cast %54 : vector<1x1x16x16xf32> to vector<16x16xf32>
    %56 = vector.shape_cast %53 : vector<16x16xf32> to vector<1x1x16x16xf32>
    tpu.vector_store %arg5[%c0_22, %c2, %c0_23, %c0_24], %56 {strides = array<i32>} : memref<1x4x16x16xf32, #tpu.memory_space<vmem>>, vector<1x1x16x16xf32>,
    %cst_25 = arith.constant dense<0.000000e+00> : vector<16x16xf32>
    %57 = tpu.matmul %53, %42, %cst_25 {dimension_numbers = #tpu.dot_dimension_numbers<[1], [0], [0], [1], [0, 0, 1, 1], [], []>} : vector<16x16xf32>, vector<16x16xf32>, vector<16x16xf32> -> vector<16x16xf32>
    %58 = vector.extract_strided_slice %3 {offsets = [0, 48], sizes = [16, 16], strides = [1, 1]} : vector<16x192xf32> to vector<16x16xf32>
    %59 = vector.extract_strided_slice %3 {offsets = [0, 112], sizes = [16, 16], strides = [1, 1]} : vector<16x192xf32> to vector<16x16xf32>
    %60 = vector.extract_strided_slice %3 {offsets = [0, 176], sizes = [16, 16], strides = [1, 1]} : vector<16x192xf32> to vector<16x16xf32>
    %cst_26 = arith.constant dense<0.000000e+00> : vector<16x16xf32>
    %61 = tpu.matmul %58, %59, %cst_26 {dimension_numbers = #tpu.dot_dimension_numbers<[1], [1], [0], [0], [0, 0, 1, 0], [], []>} : vector<16x16xf32>, vector<16x16xf32>, vector<16x16xf32> -> vector<16x16xf32>
    %cst_27 = arith.constant dense<0xFF800000> : vector<16xf32>
    %62 = vector.multi_reduction <maximumf>, %61, %cst_27 [1] : vector<16x16xf32> to vector<16xf32>
    %63 = vector.shape_cast %62 : vector<16xf32> to vector<16x1xf32>
    %64 = vector.broadcast %63 : vector<16x1xf32> to vector<16x16xf32>
    %65 = arith.subf %61, %64 : vector<16x16xf32>
    %66 = math.exp %65 : vector<16x16xf32>
    %cst_28 = arith.constant dense<0.000000e+00> : vector<16xf32>
    %67 = vector.multi_reduction <add>, %66, %cst_28 [1] : vector<16x16xf32> to vector<16xf32>
    %68 = vector.shape_cast %67 : vector<16xf32> to vector<16x1xf32>
    %69 = tpu.reciprocal %68 : vector<16x1xf32> -> vector<16x1xf32>
    %70 = vector.broadcast %69 : vector<16x1xf32> to vector<16x16xf32>
    %71 = arith.mulf %66, %70 : vector<16x16xf32>
    %c0_29 = arith.constant 0 : index
    %c3 = arith.constant 3 : index
    %c0_30 = arith.constant 0 : index
    %c0_31 = arith.constant 0 : index
    %72 = vector.load %arg5[%c0_29, %c3, %c0_30, %c0_31] : memref<1x4x16x16xf32, #tpu.memory_space<vmem>>, vector<1x1x16x16xf32>
    %73 = vector.shape_cast %72 : vector<1x1x16x16xf32> to vector<16x16xf32>
    %74 = vector.shape_cast %71 : vector<16x16xf32> to vector<1x1x16x16xf32>
    tpu.vector_store %arg5[%c0_29, %c3, %c0_30, %c0_31], %74 {strides = array<i32>} : memref<1x4x16x16xf32, #tpu.memory_space<vmem>>, vector<1x1x16x16xf32>,
    %cst_32 = arith.constant dense<0.000000e+00> : vector<16x16xf32>
    %75 = tpu.matmul %71, %60, %cst_32 {dimension_numbers = #tpu.dot_dimension_numbers<[1], [0], [0], [1], [0, 0, 1, 1], [], []>} : vector<16x16xf32>, vector<16x16xf32>, vector<16x16xf32> -> vector<16x16xf32>
    %76 = tpu.concatenate %21, %39, %57, %75 in 1 : vector<16x16xf32>, vector<16x16xf32>, vector<16x16xf32>, vector<16x16xf32> -> vector<16x64xf32>
    %c0_33 = arith.constant 0 : index
    %c0_34 = arith.constant 0 : index
    %77 = vector.load %arg3[%c0_33, %c0_34] : memref<64x64xf32, #tpu.memory_space<vmem>>, vector<64x64xf32>
    %cst_35 = arith.constant dense<0.000000e+00> : vector<16x64xf32>
    %78 = tpu.matmul %76, %77, %cst_35 {dimension_numbers = #tpu.dot_dimension_numbers<[1], [0], [0], [1], [0, 0, 1, 1], [], []>} : vector<16x64xf32>, vector<64x64xf32>, vector<16x64xf32> -> vector<16x64xf32>
    %c0_36 = arith.constant 0 : index
    %c0_37 = arith.constant 0 : index
    %79 = vector.load %arg4[%c0_36, %c0_37] : memref<1x64xf32, #tpu.memory_space<vmem>>, vector<1x64xf32>
    %80 = vector.broadcast %79 : vector<1x64xf32> to vector<16x64xf32>
    %81 = arith.addf %78, %80 : vector<16x64xf32>
    %c0_38 = arith.constant 0 : index
    %c0_39 = arith.constant 0 : index
    %c0_40 = arith.constant 0 : index
    %82 = vector.load %arg6[%c0_38, %c0_39, %c0_40] : memref<1x16x64xf32, #tpu.memory_space<vmem>>, vector<1x16x64xf32>
    %83 = vector.shape_cast %82 : vector<1x16x64xf32> to vector<16x64xf32>
    %84 = vector.shape_cast %81 : vector<16x64xf32> to vector<1x16x64xf32>
    tpu.vector_store %arg6[%c0_38, %c0_39, %c0_40], %84 {strides = array<i32>} : memref<1x16x64xf32, #tpu.memory_space<vmem>>, vector<1x16x64xf32>,
    return
  }
  func.func @transform_0(%arg0: i32) -> (i32, i32, i32) {
    %c0_i32 = arith.constant 0 : i32
    %c0_i32_0 = arith.constant 0 : i32
    %c0_i32_1 = arith.constant 0 : i32
    return %arg0, %c0_i32, %c0_i32_0 : i32, i32, i32
  }
  func.func @transform_1(%arg0: i32) -> (i32, i32) {
    %c0_i32 = arith.constant 0 : i32
    %c0_i32_0 = arith.constant 0 : i32
    %c0_i32_1 = arith.constant 0 : i32
    return %c0_i32, %c0_i32_0 : i32, i32
  }
  func.func @transform_2(%arg0: i32) -> (i32, i32) {
    %c0_i32 = arith.constant 0 : i32
    %c0_i32_0 = arith.constant 0 : i32
    %c0_i32_1 = arith.constant 0 : i32
    return %c0_i32, %c0_i32_0 : i32, i32
  }
  func.func @transform_3(%arg0: i32) -> (i32, i32) {
    %c0_i32 = arith.constant 0 : i32
    %c0_i32_0 = arith.constant 0 : i32
    %c0_i32_1 = arith.constant 0 : i32
    return %c0_i32, %c0_i32_0 : i32, i32
  }
  func.func @transform_4(%arg0: i32) -> (i32, i32, i32, i32) {
    %c0_i32 = arith.constant 0 : i32
    %c0_i32_0 = arith.constant 0 : i32
    %c0_i32_1 = arith.constant 0 : i32
    %c0_i32_2 = arith.constant 0 : i32
    return %arg0, %c0_i32, %c0_i32_0, %c0_i32_1 : i32, i32, i32, i32
  }
  func.func @transform_5(%arg0: i32) -> (i32, i32, i32) {
    %c0_i32 = arith.constant 0 : i32
    %c0_i32_0 = arith.constant 0 : i32
    %c0_i32_1 = arith.constant 0 : i32
    return %arg0, %c0_i32, %c0_i32_0 : i32, i32, i32
  }
}

</mosaic_0001>

<llo_original>
// kernel: tpu_custom_call.1
$region0: #{tpu_custom_call.1}
  #allocation0 [shape = 'u32[]', space=smem, size = 0x4, offset = 0x4, fixed_abs, tag = 'smem constant byte address 0x4 - core index']
  #allocation1 [shape = 'u32[144,128]{1,0:T(1,128)}', space=vmem, size = 0x12000, scoped, tag = 'internal scratch']
  %s0 = inlined_call_operand.hbm [shape: f32[2,16,64], index: 0, kind: input, shape index: {}]
  %s1 = inlined_call_operand.hbm [shape: f32[64,192], index: 1, kind: input, shape index: {}]
  %s2 = inlined_call_operand.hbm [shape: f32[64,64], index: 2, kind: input, shape index: {}]
  %s3 = inlined_call_operand.vmem [shape: f32[1,64], index: 3, kind: input, shape index: {}]
  %s4 = inlined_call_operand.hbm [shape: f32[2,4,16,16], index: 4, kind: output, shape index: {0}]
  %s5 = inlined_call_operand.hbm [shape: f32[2,16,64], index: 5, kind: output, shape index: {1}]
  %6 = xla_tuple %s4, %s5
  %s7 = sld [smem:[#allocation0]]
  $region69: #{tpu_custom_call.1} parent=0
    _
  %s9 = ssub.s32 1, %s7
  %s10 = scalar_select 0, %s9, %s7
  $region1: #{tpu_custom_call.1} parent=0
    #allocation2 [shape = 'u8[16384]{0}', space=vmem, size = 0x4000, scoped, tag = 'input window, operand 0']
    #allocation3 [shape = 's32[2]{0}', space=sflag, size = 0x8, scoped, tag = 'scoped memory for tpu_custom_call.1']
    #allocation4 [shape = 's32[2]{0}', space=sflag, size = 0x8, scoped, tag = 'scoped memory for tpu_custom_call.1']
    #allocation5 [shape = 'u8[65536]{0}', space=vmem, size = 0x10000, scoped, tag = 'input window, operand 1, single buffered']
    #allocation6 [shape = 's32[1]{0}', space=sflag, size = 0x4, scoped, tag = 'scoped memory for tpu_custom_call.1']
    #allocation7 [shape = 'u8[32768]{0}', space=vmem, size = 0x8000, scoped, tag = 'input window, operand 2, single buffered']
    #allocation8 [shape = 'u8[65536]{0}', space=vmem, size = 0x10000, scoped, tag = 'output window, operand 0']
    #allocation9 [shape = 'u8[16384]{0}', space=vmem, size = 0x4000, scoped, tag = 'output window, operand 1']
    #allocation10 [shape = 's32[2]{0}', space=sflag, size = 0x8, scoped, tag = 'scoped memory for tpu_custom_call.1']
    %11 = vsyncpa [#allocation3], 0
    %s12 = scalar_lea.sflag [#allocation3], 1
    %13 = vsyncpa %s12, 0
    %14 = vsyncpa [#allocation6], 0
    %15 = vsyncpa [#allocation4], 0
    %s16 = scalar_lea.sflag [#allocation4], 1
    %17 = vsyncpa %s16, 0
    %18 = vsyncpa [#allocation10], 0
    %s19 = scalar_lea.sflag [#allocation10], 1
    %20 = vsyncpa %s19, 0
    loop: start=0, step=1, limit=4
    $region2: #{tpu_custom_call.1} parent=1 // loop_pre_header
      _
    $region3: #{tpu_custom_call.1} parent=1 // loop_header
      %s22 = sphi 0, %s26
      %p23 = scmp.ge.s32.totalorder %s22, 4
      %s32 = sphi 0, %s34
      %s35 = sphi 0, %s32
      %s36 = sphi 0, %s35
      %s52 = sphi 0, %s36
      %s56 = sphi 0, %s56
      %s58 = sphi 0, %s56
      %s59 = sphi 0, %s58
      %s73 = sphi 0, %s59
      %s77 = sphi 0, %s77
      %s79 = sphi 0, %s77
      %s80 = sphi 0, %s79
      %s94 = sphi 0, %s80
      %s98 = sphi 0, %s98
      %s100 = sphi 0, %s98
      %s101 = sphi 0, %s100
      %s115 = sphi 0, %s101
      %s121 = sphi 0, %s123
      %s124 = sphi 0, %s121
      %s125 = sphi 0, %s124
      %s141 = sphi 0, %s125
      %s147 = sphi 0, %s149
      %s150 = sphi 0, %s147
      %s151 = sphi 0, %s150
      %s167 = sphi 0, %s151
    $region4: #{tpu_custom_call.1} parent=1 // loop_header_branch
      %25 = sbr.rel (%p23) target = $region8
    $region5: #{tpu_custom_call.1} parent=1 // loop_body
      %s27 = ssub.s32 %s22, 1
      %s28 = ssub.s32 %s22, 2
      %s29 = sadd.s32 %s22, 1
      %s30 = ssub.s32 %s22, %s29
      %p31 = scmp.eq.s32.totalorder %s30, 0
      %s33 = sadd.s32 %s32, 1
      %s34 = scalar_select %p31, %s32, %s33
      %p37 = pneg %p31
      %p38 = scmp.eq.s32.totalorder %s22, 1
      %p39 = por %p37, %p38
      %p40 = scmp.ne.s32.totalorder %s32, %s35
      %p41 = scmp.eq.s32.totalorder %s22, 0
      %p42 = por %p40, %p41
      %p43 = scmp.ne.s32.totalorder %s32, %s35
      %p44 = scmp.eq.s32.totalorder %s27, 1
      %p45 = por %p43, %p44
      %p46 = scmp.ne.s32.totalorder %s35, %s36
      %p47 = scmp.eq.s32.totalorder %s27, 0
      %p48 = por %p46, %p47
      %p49 = scmp.ne.s32.totalorder %s35, %s36
      %p50 = scmp.eq.s32.totalorder %s28, 1
      %p51 = por %p49, %p50
      %p53 = scmp.ne.s32.totalorder %s36, %s52
      %p54 = scmp.eq.s32.totalorder %s28, 0
      %p55 = por %p53, %p54
      %s57 = sadd.s32 %s56, 1
      %p60 = scmp.eq.s32.totalorder %s22, 1
      %p61 = scmp.ne.s32.totalorder %s56, %s58
      %p62 = scmp.eq.s32.totalorder %s22, 0
      %p63 = por %p61, %p62
      %p64 = scmp.ne.s32.totalorder %s56, %s58
      %p65 = scmp.eq.s32.totalorder %s27, 1
      %p66 = por %p64, %p65
      %p67 = scmp.ne.s32.totalorder %s58, %s59
      %p68 = scmp.eq.s32.totalorder %s27, 0
      %p69 = por %p67, %p68
      %p70 = scmp.ne.s32.totalorder %s58, %s59
      %p71 = scmp.eq.s32.totalorder %s28, 1
      %p72 = por %p70, %p71
      %p74 = scmp.ne.s32.totalorder %s59, %s73
      %p75 = scmp.eq.s32.totalorder %s28, 0
      %p76 = por %p74, %p75
      %s78 = sadd.s32 %s77, 1
      %p81 = scmp.eq.s32.totalorder %s22, 1
      %p82 = scmp.ne.s32.totalorder %s77, %s79
      %p83 = scmp.eq.s32.totalorder %s22, 0
      %p84 = por %p82, %p83
      %p85 = scmp.ne.s32.totalorder %s77, %s79
      %p86 = scmp.eq.s32.totalorder %s27, 1
      %p87 = por %p85, %p86
      %p88 = scmp.ne.s32.totalorder %s79, %s80
      %p89 = scmp.eq.s32.totalorder %s27, 0
      %p90 = por %p88, %p89
      %p91 = scmp.ne.s32.totalorder %s79, %s80
      %p92 = scmp.eq.s32.totalorder %s28, 1
      %p93 = por %p91, %p92
      %p95 = scmp.ne.s32.totalorder %s80, %s94
      %p96 = scmp.eq.s32.totalorder %s28, 0
      %p97 = por %p95, %p96
      %s99 = sadd.s32 %s98, 1
      %p102 = scmp.eq.s32.totalorder %s22, 1
      %p103 = scmp.ne.s32.totalorder %s98, %s100
      %p104 = scmp.eq.s32.totalorder %s22, 0
      %p105 = por %p103, %p104
      %p106 = scmp.ne.s32.totalorder %s98, %s100
      %p107 = scmp.eq.s32.totalorder %s27, 1
      %p108 = por %p106, %p107
      %p109 = scmp.ne.s32.totalorder %s100, %s101
      %p110 = scmp.eq.s32.totalorder %s27, 0
      %p111 = por %p109, %p110
      %p112 = scmp.ne.s32.totalorder %s100, %s101
      %p113 = scmp.eq.s32.totalorder %s28, 1
      %p114 = por %p112, %p113
      %p116 = scmp.ne.s32.totalorder %s101, %s115
      %p117 = scmp.eq.s32.totalorder %s28, 0
      %p118 = por %p116, %p117
      %s119 = ssub.s32 %s22, %s29
      %p120 = scmp.eq.s32.totalorder %s119, 0
      %s122 = sadd.s32 %s121, 1
      %s123 = scalar_select %p120, %s121, %s122
      %p126 = pneg %p120
      %p127 = scmp.eq.s32.totalorder %s22, 1
      %p128 = por %p126, %p127
      %p129 = scmp.ne.s32.totalorder %s121, %s124
      %p130 = scmp.eq.s32.totalorder %s22, 0
      %p131 = por %p129, %p130
      %p132 = scmp.ne.s32.totalorder %s121, %s124
      %p133 = scmp.eq.s32.totalorder %s27, 1
      %p134 = por %p132, %p133
      %p135 = scmp.ne.s32.totalorder %s124, %s125
      %p136 = scmp.eq.s32.totalorder %s27, 0
      %p137 = por %p135, %p136
      %p138 = scmp.ne.s32.totalorder %s124, %s125
      %p139 = scmp.eq.s32.totalorder %s28, 1
      %p140 = por %p138, %p139
      %p142 = scmp.ne.s32.totalorder %s125, %s141
      %p143 = scmp.eq.s32.totalorder %s28, 0
      %p144 = por %p142, %p143
      %s145 = ssub.s32 %s22, %s29
      %p146 = scmp.eq.s32.totalorder %s145, 0
      %s148 = sadd.s32 %s147, 1
      %s149 = scalar_select %p146, %s147, %s148
      %p152 = pneg %p146
      %p153 = scmp.eq.s32.totalorder %s22, 1
      %p154 = por %p152, %p153
      %p155 = scmp.ne.s32.totalorder %s147, %s150
      %p156 = scmp.eq.s32.totalorder %s22, 0
      %p157 = por %p155, %p156
      %p158 = scmp.ne.s32.totalorder %s147, %s150
      %p159 = scmp.eq.s32.totalorder %s27, 1
      %p160 = por %p158, %p159
      %p161 = scmp.ne.s32.totalorder %s150, %s151
      %p162 = scmp.eq.s32.totalorder %s27, 0
      %p163 = por %p161, %p162
      %p164 = scmp.ne.s32.totalorder %s150, %s151
      %p165 = scmp.eq.s32.totalorder %s28, 1
      %p166 = por %p164, %p165
      %p168 = scmp.ne.s32.totalorder %s151, %s167
      %p169 = scmp.eq.s32.totalorder %s28, 0
      %p170 = por %p168, %p169
      %p171 = scmp.le.s32.totalorder 1, %s22
      %p172 = scmp.lt.s32.totalorder %s22, 3
      %p173 = pnand %p171, %p172
      %p174 = pneg %p173
      // Predicated region
      $region9: #{tpu_custom_call.1} parent=5 // pred_check
        _
      $region10: #{tpu_custom_call.1} parent=5 // pred_check_branch
        %176 = sbr.rel (%p173) target = $region12
      $region11: #{tpu_custom_call.1} parent=5 // pred_region
        %s177 = ssub.s32 %s22, 1
        // Predicated region
        $region13: #{tpu_custom_call.1} parent=11 // pred_check
          %p178 = pneg %p69
        $region14: #{tpu_custom_call.1} parent=11 // pred_check_branch
          %180 = sbr.rel (%p178) target = $region16
        $region15: #{tpu_custom_call.1} parent=11 // pred_region
          %s182 = ssub.s32 2048, 2048
          %183 = vsyncadd [#allocation6], %s182
          %s184 = sshll.u32 [#allocation5], 4
          %s185 = int_to_ptr.vmem [resolvable:$true] %s184
          %190 = dma.hbm_to_vmem [thread:$0]  %s1, 2048, %s185, [#allocation6], 256, 256, 16
        $region16: #{tpu_custom_call.1} parent=11 // pred_fallthru
          _
        // Predicated region
        $region17: #{tpu_custom_call.1} parent=11 // pred_check
          %p191 = pneg %p90
        $region18: #{tpu_custom_call.1} parent=11 // pred_check_branch
          %193 = sbr.rel (%p191) target = $region20
        $region19: #{tpu_custom_call.1} parent=11 // pred_region
          %s195 = ssub.s32 1024, 1024
          %196 = vsyncadd [#allocation6], %s195
          %s197 = sshll.u32 [#allocation7], 4
          %s198 = int_to_ptr.vmem [resolvable:$true] %s197
          %203 = dma.hbm_to_vmem [thread:$0]  %s2, 1024, %s198, [#allocation6], 128, 128, 8
        $region20: #{tpu_custom_call.1} parent=11 // pred_fallthru
          _
        // Predicated region
        $region21: #{tpu_custom_call.1} parent=11 // pred_check
          %p204 = pneg %p111
        $region22: #{tpu_custom_call.1} parent=11 // pred_check_branch
          %206 = sbr.rel (%p204) target = $region24
        $region23: #{tpu_custom_call.1} parent=11 // pred_region
          _
        $region24: #{tpu_custom_call.1} parent=11 // pred_fallthru
          _
      $region12: #{tpu_custom_call.1} parent=5 // pred_fallthru
        _
      %p207 = scmp.lt.s32.totalorder %s22, 2
      // Predicated region
      $region25: #{tpu_custom_call.1} parent=5 // pred_check
        %p208 = pneg %p207
      $region26: #{tpu_custom_call.1} parent=5 // pred_check_branch
        %210 = sbr.rel (%p208) target = $region28
      $region27: #{tpu_custom_call.1} parent=5 // pred_region
        // Predicated region
        $region29: #{tpu_custom_call.1} parent=27 // pred_check
          %p211 = pneg %p42
        $region30: #{tpu_custom_call.1} parent=27 // pred_check_branch
          %213 = sbr.rel (%p211) target = $region32
        $region31: #{tpu_custom_call.1} parent=27 // pred_region
          %s214 = sand.u32 %s32, 1
          %s215 = scalar_lea.sflag [#allocation3], %s214
          %s216 = sand.u32 %s32, 1
          %s217 = smul.addr %s216, 16
          %s218 = scalar_lea.vmem [#allocation2], %s217
          %s220 = ssub.s32 256, 256
          %221 = vsyncadd %s215, %s220
          %s222 = smul.addr %s22, 2
          %s223 = smul.addr %s222, 128
          %s224 = scalar_lea.hbm %s0, %s223
          %s225 = sshll.u32 %s218, 4
          %s226 = int_to_ptr.vmem [resolvable:$true] %s225
          %231 = dma.hbm_to_vmem [thread:$0]  %s224, 256, %s226, %s215, 128, 128, 8
        $region32: #{tpu_custom_call.1} parent=27 // pred_fallthru
          _
      $region28: #{tpu_custom_call.1} parent=5 // pred_fallthru
        _
      %p232 = scmp.le.s32.totalorder 1, %s22
      %p233 = scmp.lt.s32.totalorder %s22, 3
      %p234 = pnand %p232, %p233
      %p235 = pneg %p234
      // Predicated region
      $region33: #{tpu_custom_call.1} parent=5 // pred_check
        _
      $region34: #{tpu_custom_call.1} parent=5 // pred_check_branch
        %237 = sbr.rel (%p234) target = $region36
      $region35: #{tpu_custom_call.1} parent=5 // pred_region
        %s238 = ssub.s32 %s22, 1
        %s239 = sand.u32 %s35, 1
        %s240 = scalar_lea.sflag [#allocation3], %s239
        %s241 = sand.u32 %s35, 1
        %s242 = smul.addr %s241, 16
        %s243 = scalar_lea.vmem [#allocation2], %s242
        // Predicated region
        $region37: #{tpu_custom_call.1} parent=35 // pred_check
          %p244 = pneg %p48
        $region38: #{tpu_custom_call.1} parent=35 // pred_check_branch
          %246 = sbr.rel (%p244) target = $region40
        $region39: #{tpu_custom_call.1} parent=35 // pred_region
          %247 = dma.done %s240, 256
        $region40: #{tpu_custom_call.1} parent=35 // pred_fallthru
          _
        // Predicated region
        $region41: #{tpu_custom_call.1} parent=35 // pred_check
          %p248 = pneg %p69
        $region42: #{tpu_custom_call.1} parent=35 // pred_check_branch
          %250 = sbr.rel (%p248) target = $region44
        $region43: #{tpu_custom_call.1} parent=35 // pred_region
          %251 = dma.done [#allocation6], 2048
        $region44: #{tpu_custom_call.1} parent=35 // pred_fallthru
          _
        // Predicated region
        $region45: #{tpu_custom_call.1} parent=35 // pred_check
          %p252 = pneg %p90
        $region46: #{tpu_custom_call.1} parent=35 // pred_check_branch
          %254 = sbr.rel (%p252) target = $region48
        $region47: #{tpu_custom_call.1} parent=35 // pred_region
          %255 = dma.done [#allocation6], 1024
        $region48: #{tpu_custom_call.1} parent=35 // pred_fallthru
          _
        %s256 = sand.u32 %s35, 1
        %s257 = scalar_lea.sflag [#allocation3], %s256
        %s258 = sand.u32 %s35, 1
        %s259 = smul.addr %s258, 16
        %s260 = scalar_lea.vmem [#allocation2], %s259
        %p261 = pneg %p48
        %p262 = pneg %p45
        %p263 = pneg %p69
        %p264 = pneg %p66
        %p265 = pneg %p90
        %p266 = pneg %p87
        %p267 = pneg %p111
        %p268 = pneg %p108
        %p269 = pneg %p137
        %p270 = pneg %p134
        %s271 = sand.u32 %s124, 1
        %s272 = scalar_lea.sflag [#allocation4], %s271
        %s273 = sand.u32 %s124, 1
        %s274 = smul.addr %s273, 64
        %s275 = scalar_lea.vmem [#allocation8], %s274
        %p276 = pneg %p163
        %p277 = pneg %p160
        %s278 = sand.u32 %s150, 1
        %s279 = scalar_lea.sflag [#allocation10], %s278
        %s280 = sand.u32 %s150, 1
        %s281 = smul.addr %s280, 16
        %s282 = scalar_lea.vmem [#allocation9], %s281
        %v283 = vld [vmem:[%s243] sm:$0xff]
        %v284 = vld [vmem:[%s243 + $0x8] sm:$0xff]
        %v285 = vld [vmem:[#allocation5] sm:$0xff]
        %v286 = vld [vmem:[#allocation5 + $0x8] sm:$0xff]
        %v287 = vld [vmem:[#allocation5 + $0x10] sm:$0xff]
        %v288 = vld [vmem:[#allocation5 + $0x18] sm:$0xff]
        %v289 = vld [vmem:[#allocation5 + $0x20] sm:$0xff]
        %v290 = vld [vmem:[#allocation5 + $0x28] sm:$0xff]
        %v291 = vld [vmem:[#allocation5 + $0x30] sm:$0xff]
        %v292 = vld [vmem:[#allocation5 + $0x38] sm:$0xff]
        %v293 = vld [vmem:[#allocation5 + $0x40] sm:$0xff]
        %v294 = vld [vmem:[#allocation5 + $0x48] sm:$0xff]
        %v295 = vld [vmem:[#allocation5 + $0x50] sm:$0xff]
        %v296 = vld [vmem:[#allocation5 + $0x58] sm:$0xff]
        %v297 = vld [vmem:[#allocation5 + $0x60] sm:$0xff]
        %v298 = vld [vmem:[#allocation5 + $0x68] sm:$0xff]
        %v299 = vld [vmem:[#allocation5 + $0x70] sm:$0xff]
        %v300 = vld [vmem:[#allocation5 + $0x78] sm:$0xff]
        %vm301 = vcmask 523264
        %v303 = vsel %vm301, %v283, 0
        %v306 = vsel %vm301, %v284, 0
        %308 = vmatprep.subr.mxu0 %v286
        %309 = vmatpush1.msra.mxu0 %v285
        %310 = vmatprep.subr.mxu0 %v288
        %311 = vmatpush1.msra.mxu0 %v287
        %312 = vmatprep.subr.mxu0 %v290
        %313 = vmatpush1.msra.mxu0 %v289
        %314 = vmatprep.subr.mxu0 %v292
        %315 = vmatpush1.msra.mxu0 %v291
        %316 = vmatprep.subr.mxu0 %v294
        %317 = vmatpush1.msra.mxu0 %v293
        %318 = vmatprep.subr.mxu0 %v296
        %319 = vmatpush1.msra.mxu0 %v295
        %320 = vmatprep.subr.mxu0 %v298
        %321 = vmatpush1.msra.mxu0 %v297
        %322 = vmatprep.subr.mxu0 %v300
        %323 = vmatpush1.msra.mxu0 %v299
        %324 = vmatprep.subr.mxu0 0.0
        %325 = vmatpush1.msra.mxu0 0.0
        %326 = vmatprep.subr.mxu0 0.0
        %327 = vmatpush1.msra.mxu0 0.0
        %328 = vmatprep.subr.mxu0 0.0
        %329 = vmatpush1.msra.mxu0 0.0
        %330 = vmatprep.subr.mxu0 0.0
        %331 = vmatpush1.msra.mxu0 0.0
        %332 = vmatprep.subr.mxu0 0.0
        %333 = vmatpush1.msra.mxu0 0.0
        %334 = vmatprep.subr.mxu0 0.0
        %335 = vmatpush1.msra.mxu0 0.0
        %336 = vmatprep.subr.mxu0 0.0
        %337 = vmatpush1.msra.mxu0 0.0
        %338 = vmatprep.subr.mxu0 0.0
        %339 = vmatpush1.msra.mxu0 0.0
        %340 = vmatprep.subr.mxu0 0.0
        %341 = vmatpush1.msra.mxu0 0.0
        %342 = vmatprep.subr.mxu0 0.0
        %343 = vmatpush1.msra.mxu0 0.0
        %344 = vmatprep.subr.mxu0 0.0
        %345 = vmatpush1.msra.mxu0 0.0
        %346 = vmatprep.subr.mxu0 0.0
        %347 = vmatpush1.msra.mxu0 0.0
        %348 = vmatprep.subr.mxu0 0.0
        %349 = vmatpush1.msra.mxu0 0.0
        %350 = vmatprep.subr.mxu0 0.0
        %351 = vmatpush1.msra.mxu0 0.0
        %352 = vmatprep.subr.mxu0 0.0
        %353 = vmatpush1.msra.mxu0 0.0
        %354 = vmatprep.subr.mxu0 0.0
        %355 = vmatpush1.msra.mxu0 0.0
        %356 = vmatprep.subr.mxu0 0.0
        %357 = vmatpush1.msra.mxu0 0.0
        %358 = vmatprep.subr.mxu0 0.0
        %359 = vmatpush1.msra.mxu0 0.0
        %360 = vmatprep.subr.mxu0 0.0
        %361 = vmatpush1.msra.mxu0 0.0
        %362 = vmatprep.subr.mxu0 0.0
        %363 = vmatpush1.msra.mxu0 0.0
        %364 = vmatprep.subr.mxu0 0.0
        %365 = vmatpush1.msra.mxu0 0.0
        %366 = vmatprep.subr.mxu0 0.0
        %367 = vmatpush1.msra.mxu0 0.0
        %368 = vmatprep.subr.mxu0 0.0
        %369 = vmatpush1.msra.mxu0 0.0
        %370 = vmatprep.subr.mxu0 0.0
        %371 = vmatpush1.msra.mxu0 0.0
        %372 = vmatprep.mubr.f32.mxu0 0.0
        %373 = vmatmul.mubr.f32.gmra.mrb[0].mxu0 %v303
        %v374 = vpop.f32.mrb[0].mxu0
        %v375 = vadd.f32 0.0, %v374
        %v376 = vpop.f32.mrb[0].mxu0
        %v377 = vadd.f32 0.0, %v376
        %378 = vmatprep.mubr.f32.mxu0 0.0
        %379 = vmatmul.mubr.f32.gmra.mrb[0].mxu0 %v306
        %v380 = vpop.f32.mrb[0].mxu0
        %v381 = vadd.f32 0.0, %v380
        %v382 = vpop.f32.mrb[0].mxu0
        %v383 = vadd.f32 0.0, %v382
        %384 = vdwg.mxu0
        %387 = vrot.lane.b32.xlu0 %v375, 64
        %v388 = vpop.permute.xlu0 %387
        %389 = vrot.lane.b32.xlu0 %v381, 64
        %v390 = vpop.permute.xlu0 %389
        %vm391 = vcmask 130048
        %v392 = vsel %vm391, %v375, 0
        %v394 = vsel %vm391, %v381, 0
        %v396 = vsel %vm391, %v388, 0
        %v398 = vsel %vm391, %v390, 0
        %400 = vmatprep.subr.mxu0 0.0
        %401 = vmatpush1.xpose.msra.mxu0 %v396
        %402 = vmatprep.subr.mxu0 0.0
        %403 = vmatpush1.xpose.msra.mxu0 %v398
        %404 = vmatprep.subr.mxu0 0.0
        %405 = vmatpush1.xpose.msra.mxu0 0.0
        %406 = vmatprep.subr.mxu0 0.0
        %407 = vmatpush1.xpose.msra.mxu0 0.0
        %408 = vmatprep.subr.mxu0 0.0
        %409 = vmatpush1.xpose.msra.mxu0 0.0
        %410 = vmatprep.subr.mxu0 0.0
        %411 = vmatpush1.xpose.msra.mxu0 0.0
        %412 = vmatprep.subr.mxu0 0.0
        %413 = vmatpush1.xpose.msra.mxu0 0.0
        %414 = vmatprep.subr.mxu0 0.0
        %415 = vmatpush1.xpose.msra.mxu0 0.0
        %416 = vmatprep.subr.mxu0 0.0
        %417 = vmatpush1.xpose.msra.mxu0 0.0
        %418 = vmatprep.subr.mxu0 0.0
        %419 = vmatpush1.xpose.msra.mxu0 0.0
        %420 = vmatprep.subr.mxu0 0.0
        %421 = vmatpush1.xpose.msra.mxu0 0.0
        %422 = vmatprep.subr.mxu0 0.0
        %423 = vmatpush1.xpose.msra.mxu0 0.0
        %424 = vmatprep.subr.mxu0 0.0
        %425 = vmatpush1.xpose.msra.mxu0 0.0
        %426 = vmatprep.subr.mxu0 0.0
        %427 = vmatpush1.xpose.msra.mxu0 0.0
        %428 = vmatprep.subr.mxu0 0.0
        %429 = vmatpush1.xpose.msra.mxu0 0.0
        %430 = vmatprep.subr.mxu0 0.0
        %431 = vmatpush1.xpose.msra.mxu0 0.0
        %432 = vmatprep.subr.mxu0 0.0
        %433 = vmatpush1.xpose.msra.mxu0 0.0
        %434 = vmatprep.subr.mxu0 0.0
        %435 = vmatpush1.xpose.msra.mxu0 0.0
        %436 = vmatprep.subr.mxu0 0.0
        %437 = vmatpush1.xpose.msra.mxu0 0.0
        %438 = vmatprep.subr.mxu0 0.0
        %439 = vmatpush1.xpose.msra.mxu0 0.0
        %440 = vmatprep.subr.mxu0 0.0
        %441 = vmatpush1.xpose.msra.mxu0 0.0
        %442 = vmatprep.subr.mxu0 0.0
        %443 = vmatpush1.xpose.msra.mxu0 0.0
        %444 = vmatprep.subr.mxu0 0.0
        %445 = vmatpush1.xpose.msra.mxu0 0.0
        %446 = vmatprep.subr.mxu0 0.0
        %447 = vmatpush1.xpose.msra.mxu0 0.0
        %448 = vmatprep.subr.mxu0 0.0
        %449 = vmatpush1.xpose.msra.mxu0 0.0
        %450 = vmatprep.subr.mxu0 0.0
        %451 = vmatpush1.xpose.msra.mxu0 0.0
        %452 = vmatprep.subr.mxu0 0.0
        %453 = vmatpush1.xpose.msra.mxu0 0.0
        %454 = vmatprep.subr.mxu0 0.0
        %455 = vmatpush1.xpose.msra.mxu0 0.0
        %456 = vmatprep.subr.mxu0 0.0
        %457 = vmatpush1.xpose.msra.mxu0 0.0
        %458 = vmatprep.subr.mxu0 0.0
        %459 = vmatpush1.xpose.msra.mxu0 0.0
        %460 = vmatprep.subr.mxu0 0.0
        %461 = vmatpush1.xpose.msra.mxu0 0.0
        %462 = vmatprep.subr.mxu0 0.0
        %463 = vmatpush1.xpose.msra.mxu0 0.0
        %464 = vmatprep.mubr.f32.mxu0 0.0
        %465 = vmatmul.mubr.f32.gmra.mrb[0].mxu0 %v392
        %v466 = vpop.f32.mrb[0].mxu0
        %v467 = vadd.f32 0.0, %v466
        %v468 = vpop.f32.mrb[0].mxu0
        %469 = vmatprep.mubr.f32.mxu0 0.0
        %470 = vmatmul.mubr.f32.gmra.mrb[0].mxu0 %v394
        %v471 = vpop.f32.mrb[0].mxu0
        %v472 = vadd.f32 0.0, %v471
        %v473 = vpop.f32.mrb[0].mxu0
        %474 = vdwg.mxu0
        %v475 = vsel %vm391, %v467, -inf
        %476 = vmax.xlane.f32.xlu0 %v475
        %v477 = vpop.xlane.xlu0 %476
        %v478 = vsel %vm391, %v472, -inf
        %479 = vmax.xlane.f32.xlu0 %v478
        %v480 = vpop.xlane.xlu0 %479
        %v481 = vsub.f32 %v467, %v477
        %v482 = vsub.f32 %v472, %v480
        %v483 = vmul.f32 %v481, 1.442695
        %v484 = vpow.pop %v483
        %v485 = vmul.f32 %v482, 1.442695
        %v486 = vpow.pop %v485
        %v487 = vsel %vm391, %v484, 0.0
        %488 = vadd.xlane.f32.xlu0 %v487
        %v489 = vpop.xlane.xlu0 %488
        %v490 = vsel %vm391, %v486, 0.0
        %491 = vadd.xlane.f32.xlu0 %v490
        %v492 = vpop.xlane.xlu0 %491
        %v493 = vrcp.pop %v489
        %v494 = vrcp.pop %v492
        %v495 = vmul.f32 %v484, %v493
        %v496 = vmul.f32 %v486, %v494
        %497 = vst.msk [vmem:[%s275] sm:$0xff] %vm391, %v495
        %498 = vst.msk [vmem:[%s275 + $0x8] sm:$0xff] %vm391, %v496
        %v500 = vsel %vm391, %v495, 0
        %v503 = vsel %vm391, %v496, 0
        %505 = vmatprep.subr.mxu0 0.0
        %506 = vmatpush1.msra.mxu0 %v377
        %507 = vmatprep.subr.mxu0 0.0
        %508 = vmatpush1.msra.mxu0 %v383
        %509 = vmatprep.subr.mxu0 0.0
        %510 = vmatpush1.msra.mxu0 0.0
        %511 = vmatprep.subr.mxu0 0.0
        %512 = vmatpush1.msra.mxu0 0.0
        %513 = vmatprep.subr.mxu0 0.0
        %514 = vmatpush1.msra.mxu0 0.0
        %515 = vmatprep.subr.mxu0 0.0
        %516 = vmatpush1.msra.mxu0 0.0
        %517 = vmatprep.subr.mxu0 0.0
        %518 = vmatpush1.msra.mxu0 0.0
        %519 = vmatprep.subr.mxu0 0.0
        %520 = vmatpush1.msra.mxu0 0.0
        %521 = vmatprep.subr.mxu0 0.0
        %522 = vmatpush1.msra.mxu0 0.0
        %523 = vmatprep.subr.mxu0 0.0
        %524 = vmatpush1.msra.mxu0 0.0
        %525 = vmatprep.subr.mxu0 0.0
        %526 = vmatpush1.msra.mxu0 0.0
        %527 = vmatprep.subr.mxu0 0.0
        %528 = vmatpush1.msra.mxu0 0.0
        %529 = vmatprep.subr.mxu0 0.0
        %530 = vmatpush1.msra.mxu0 0.0
        %531 = vmatprep.subr.mxu0 0.0
        %532 = vmatpush1.msra.mxu0 0.0
        %533 = vmatprep.subr.mxu0 0.0
        %534 = vmatpush1.msra.mxu0 0.0
        %535 = vmatprep.subr.mxu0 0.0
        %536 = vmatpush1.msra.mxu0 0.0
        %537 = vmatprep.subr.mxu0 0.0
        %538 = vmatpush1.msra.mxu0 0.0
        %539 = vmatprep.subr.mxu0 0.0
        %540 = vmatpush1.msra.mxu0 0.0
        %541 = vmatprep.subr.mxu0 0.0
        %542 = vmatpush1.msra.mxu0 0.0
        %543 = vmatprep.subr.mxu0 0.0
        %544 = vmatpush1.msra.mxu0 0.0
        %545 = vmatprep.subr.mxu0 0.0
        %546 = vmatpush1.msra.mxu0 0.0
        %547 = vmatprep.subr.mxu0 0.0
        %548 = vmatpush1.msra.mxu0 0.0
        %549 = vmatprep.subr.mxu0 0.0
        %550 = vmatpush1.msra.mxu0 0.0
        %551 = vmatprep.subr.mxu0 0.0
        %552 = vmatpush1.msra.mxu0 0.0
        %553 = vmatprep.subr.mxu0 0.0
        %554 = vmatpush1.msra.mxu0 0.0
        %555 = vmatprep.subr.mxu0 0.0
        %556 = vmatpush1.msra.mxu0 0.0
        %557 = vmatprep.subr.mxu0 0.0
        %558 = vmatpush1.msra.mxu0 0.0
        %559 = vmatprep.subr.mxu0 0.0
        %560 = vmatpush1.msra.mxu0 0.0
        %561 = vmatprep.subr.mxu0 0.0
        %562 = vmatpush1.msra.mxu0 0.0
        %563 = vmatprep.subr.mxu0 0.0
        %564 = vmatpush1.msra.mxu0 0.0
        %565 = vmatprep.subr.mxu0 0.0
        %566 = vmatpush1.msra.mxu0 0.0
        %567 = vmatprep.subr.mxu0 0.0
        %568 = vmatpush1.msra.mxu0 0.0
        %569 = vmatprep.mubr.f32.mxu0 0.0
        %570 = vmatmul.mubr.f32.gmra.mrb[0].mxu0 %v500
        %v571 = vpop.f32.mrb[0].mxu0
        %v572 = vadd.f32 0.0, %v571
        %v573 = vpop.f32.mrb[0].mxu0
        %574 = vmatprep.mubr.f32.mxu0 0.0
        %575 = vmatmul.mubr.f32.gmra.mrb[0].mxu0 %v503
        %v576 = vpop.f32.mrb[0].mxu0
        %v577 = vadd.f32 0.0, %v576
        %v578 = vpop.f32.mrb[0].mxu0
        %579 = vdwg.mxu0
        %580 = vrot.lane.b32.xlu0 %v375, 112
        %v581 = vpop.permute.xlu0 %580
        %582 = vrot.lane.b32.xlu0 %v381, 112
        %v583 = vpop.permute.xlu0 %582
        %584 = vrot.lane.b32.xlu0 %v375, 48
        %v585 = vpop.permute.xlu0 %584
        %586 = vrot.lane.b32.xlu0 %v381, 48
        %v587 = vpop.permute.xlu0 %586
        %v588 = vsel %vm391, %v581, 0
        %v590 = vsel %vm391, %v583, 0
        %v592 = vsel %vm391, %v585, 0
        %v594 = vsel %vm391, %v587, 0
        %596 = vmatprep.subr.mxu0 0.0
        %597 = vmatpush1.xpose.msra.mxu0 %v592
        %598 = vmatprep.subr.mxu0 0.0
        %599 = vmatpush1.xpose.msra.mxu0 %v594
        %600 = vmatprep.subr.mxu0 0.0
        %601 = vmatpush1.xpose.msra.mxu0 0.0
        %602 = vmatprep.subr.mxu0 0.0
        %603 = vmatpush1.xpose.msra.mxu0 0.0
        %604 = vmatprep.subr.mxu0 0.0
        %605 = vmatpush1.xpose.msra.mxu0 0.0
        %606 = vmatprep.subr.mxu0 0.0
        %607 = vmatpush1.xpose.msra.mxu0 0.0
        %608 = vmatprep.subr.mxu0 0.0
        %609 = vmatpush1.xpose.msra.mxu0 0.0
        %610 = vmatprep.subr.mxu0 0.0
        %611 = vmatpush1.xpose.msra.mxu0 0.0
        %612 = vmatprep.subr.mxu0 0.0
        %613 = vmatpush1.xpose.msra.mxu0 0.0
        %614 = vmatprep.subr.mxu0 0.0
        %615 = vmatpush1.xpose.msra.mxu0 0.0
        %616 = vmatprep.subr.mxu0 0.0
        %617 = vmatpush1.xpose.msra.mxu0 0.0
        %618 = vmatprep.subr.mxu0 0.0
        %619 = vmatpush1.xpose.msra.mxu0 0.0
        %620 = vmatprep.subr.mxu0 0.0
        %621 = vmatpush1.xpose.msra.mxu0 0.0
        %622 = vmatprep.subr.mxu0 0.0
        %623 = vmatpush1.xpose.msra.mxu0 0.0
        %624 = vmatprep.subr.mxu0 0.0
        %625 = vmatpush1.xpose.msra.mxu0 0.0
        %626 = vmatprep.subr.mxu0 0.0
        %627 = vmatpush1.xpose.msra.mxu0 0.0
        %628 = vmatprep.subr.mxu0 0.0
        %629 = vmatpush1.xpose.msra.mxu0 0.0
        %630 = vmatprep.subr.mxu0 0.0
        %631 = vmatpush1.xpose.msra.mxu0 0.0
        %632 = vmatprep.subr.mxu0 0.0
        %633 = vmatpush1.xpose.msra.mxu0 0.0
        %634 = vmatprep.subr.mxu0 0.0
        %635 = vmatpush1.xpose.msra.mxu0 0.0
        %636 = vmatprep.subr.mxu0 0.0
        %637 = vmatpush1.xpose.msra.mxu0 0.0
        %638 = vmatprep.subr.mxu0 0.0
        %639 = vmatpush1.xpose.msra.mxu0 0.0
        %640 = vmatprep.subr.mxu0 0.0
        %641 = vmatpush1.xpose.msra.mxu0 0.0
        %642 = vmatprep.subr.mxu0 0.0
        %643 = vmatpush1.xpose.msra.mxu0 0.0
        %644 = vmatprep.subr.mxu0 0.0
        %645 = vmatpush1.xpose.msra.mxu0 0.0
        %646 = vmatprep.subr.mxu0 0.0
        %647 = vmatpush1.xpose.msra.mxu0 0.0
        %648 = vmatprep.subr.mxu0 0.0
        %649 = vmatpush1.xpose.msra.mxu0 0.0
        %650 = vmatprep.subr.mxu0 0.0
        %651 = vmatpush1.xpose.msra.mxu0 0.0
        %652 = vmatprep.subr.mxu0 0.0
        %653 = vmatpush1.xpose.msra.mxu0 0.0
        %654 = vmatprep.subr.mxu0 0.0
        %655 = vmatpush1.xpose.msra.mxu0 0.0
        %656 = vmatprep.subr.mxu0 0.0
        %657 = vmatpush1.xpose.msra.mxu0 0.0
        %658 = vmatprep.subr.mxu0 0.0
        %659 = vmatpush1.xpose.msra.mxu0 0.0
        %660 = vmatprep.mubr.f32.mxu0 0.0
        %661 = vmatmul.mubr.f32.gmra.mrb[0].mxu0 %v588
        %v662 = vpop.f32.mrb[0].mxu0
        %v663 = vadd.f32 0.0, %v662
        %v664 = vpop.f32.mrb[0].mxu0
        %665 = vmatprep.mubr.f32.mxu0 0.0
        %666 = vmatmul.mubr.f32.gmra.mrb[0].mxu0 %v590
        %v667 = vpop.f32.mrb[0].mxu0
        %v668 = vadd.f32 0.0, %v667
        %v669 = vpop.f32.mrb[0].mxu0
        %670 = vdwg.mxu0
        %v671 = vsel %vm391, %v663, -inf
        %672 = vmax.xlane.f32.xlu0 %v671
        %v673 = vpop.xlane.xlu0 %672
        %v674 = vsel %vm391, %v668, -inf
        %675 = vmax.xlane.f32.xlu0 %v674
        %v676 = vpop.xlane.xlu0 %675
        %v677 = vsub.f32 %v663, %v673
        %v678 = vsub.f32 %v668, %v676
        %v679 = vmul.f32 %v677, 1.442695
        %v680 = vpow.pop %v679
        %v681 = vmul.f32 %v678, 1.442695
        %v682 = vpow.pop %v681
        %v683 = vsel %vm391, %v680, 0.0
        %684 = vadd.xlane.f32.xlu0 %v683
        %v685 = vpop.xlane.xlu0 %684
        %v686 = vsel %vm391, %v682, 0.0
        %687 = vadd.xlane.f32.xlu0 %v686
        %v688 = vpop.xlane.xlu0 %687
        %v689 = vrcp.pop %v685
        %v690 = vrcp.pop %v688
        %v691 = vmul.f32 %v680, %v689
        %v692 = vmul.f32 %v682, %v690
        %s693 = scalar_lea.vmem %s275, 16 [#allocation8]
        %694 = vst.msk [vmem:[%s693] sm:$0xff] %vm391, %v691
        %695 = vst.msk [vmem:[%s693 + $0x8] sm:$0xff] %vm391, %v692
        %698 = vrot.lane.b32.xlu0 %v377, 112
        %v699 = vpop.permute.xlu0 %698
        %700 = vrot.lane.b32.xlu0 %v383, 112
        %v701 = vpop.permute.xlu0 %700
        %v705 = vsel %vm391, %v691, 0
        %v708 = vsel %vm391, %v692, 0
        %710 = vmatprep.subr.mxu0 0.0
        %711 = vmatpush1.msra.mxu0 %v699
        %712 = vmatprep.subr.mxu0 0.0
        %713 = vmatpush1.msra.mxu0 %v701
        %714 = vmatprep.subr.mxu0 0.0
        %715 = vmatpush1.msra.mxu0 0.0
        %716 = vmatprep.subr.mxu0 0.0
        %717 = vmatpush1.msra.mxu0 0.0
        %718 = vmatprep.subr.mxu0 0.0
        %719 = vmatpush1.msra.mxu0 0.0
        %720 = vmatprep.subr.mxu0 0.0
        %721 = vmatpush1.msra.mxu0 0.0
        %722 = vmatprep.subr.mxu0 0.0
        %723 = vmatpush1.msra.mxu0 0.0
        %724 = vmatprep.subr.mxu0 0.0
        %725 = vmatpush1.msra.mxu0 0.0
        %726 = vmatprep.subr.mxu0 0.0
        %727 = vmatpush1.msra.mxu0 0.0
        %728 = vmatprep.subr.mxu0 0.0
        %729 = vmatpush1.msra.mxu0 0.0
        %730 = vmatprep.subr.mxu0 0.0
        %731 = vmatpush1.msra.mxu0 0.0
        %732 = vmatprep.subr.mxu0 0.0
        %733 = vmatpush1.msra.mxu0 0.0
        %734 = vmatprep.subr.mxu0 0.0
        %735 = vmatpush1.msra.mxu0 0.0
        %736 = vmatprep.subr.mxu0 0.0
        %737 = vmatpush1.msra.mxu0 0.0
        %738 = vmatprep.subr.mxu0 0.0
        %739 = vmatpush1.msra.mxu0 0.0
        %740 = vmatprep.subr.mxu0 0.0
        %741 = vmatpush1.msra.mxu0 0.0
        %742 = vmatprep.subr.mxu0 0.0
        %743 = vmatpush1.msra.mxu0 0.0
        %744 = vmatprep.subr.mxu0 0.0
        %745 = vmatpush1.msra.mxu0 0.0
        %746 = vmatprep.subr.mxu0 0.0
        %747 = vmatpush1.msra.mxu0 0.0
        %748 = vmatprep.subr.mxu0 0.0
        %749 = vmatpush1.msra.mxu0 0.0
        %750 = vmatprep.subr.mxu0 0.0
        %751 = vmatpush1.msra.mxu0 0.0
        %752 = vmatprep.subr.mxu0 0.0
        %753 = vmatpush1.msra.mxu0 0.0
        %754 = vmatprep.subr.mxu0 0.0
        %755 = vmatpush1.msra.mxu0 0.0
        %756 = vmatprep.subr.mxu0 0.0
        %757 = vmatpush1.msra.mxu0 0.0
        %758 = vmatprep.subr.mxu0 0.0
        %759 = vmatpush1.msra.mxu0 0.0
        %760 = vmatprep.subr.mxu0 0.0
        %761 = vmatpush1.msra.mxu0 0.0
        %762 = vmatprep.subr.mxu0 0.0
        %763 = vmatpush1.msra.mxu0 0.0
        %764 = vmatprep.subr.mxu0 0.0
        %765 = vmatpush1.msra.mxu0 0.0
        %766 = vmatprep.subr.mxu0 0.0
        %767 = vmatpush1.msra.mxu0 0.0
        %768 = vmatprep.subr.mxu0 0.0
        %769 = vmatpush1.msra.mxu0 0.0
        %770 = vmatprep.subr.mxu0 0.0
        %771 = vmatpush1.msra.mxu0 0.0
        %772 = vmatprep.subr.mxu0 0.0
        %773 = vmatpush1.msra.mxu0 0.0
        %774 = vmatprep.mubr.f32.mxu0 0.0
        %775 = vmatmul.mubr.f32.gmra.mrb[0].mxu0 %v705
        %v776 = vpop.f32.mrb[0].mxu0
        %v777 = vadd.f32 0.0, %v776
        %v778 = vpop.f32.mrb[0].mxu0
        %779 = vmatprep.mubr.f32.mxu0 0.0
        %780 = vmatmul.mubr.f32.gmra.mrb[0].mxu0 %v708
        %v781 = vpop.f32.mrb[0].mxu0
        %v782 = vadd.f32 0.0, %v781
        %v783 = vpop.f32.mrb[0].mxu0
        %784 = vdwg.mxu0
        %785 = vrot.lane.b32.xlu0 %v375, 96
        %v786 = vpop.permute.xlu0 %785
        %787 = vrot.lane.b32.xlu0 %v381, 96
        %v788 = vpop.permute.xlu0 %787
        %789 = vrot.lane.b32.xlu0 %v375, 32
        %v790 = vpop.permute.xlu0 %789
        %791 = vrot.lane.b32.xlu0 %v381, 32
        %v792 = vpop.permute.xlu0 %791
        %v793 = vsel %vm391, %v786, 0
        %v795 = vsel %vm391, %v788, 0
        %v797 = vsel %vm391, %v790, 0
        %v799 = vsel %vm391, %v792, 0
        %801 = vmatprep.subr.mxu0 0.0
        %802 = vmatpush1.xpose.msra.mxu0 %v797
        %803 = vmatprep.subr.mxu0 0.0
        %804 = vmatpush1.xpose.msra.mxu0 %v799
        %805 = vmatprep.subr.mxu0 0.0
        %806 = vmatpush1.xpose.msra.mxu0 0.0
        %807 = vmatprep.subr.mxu0 0.0
        %808 = vmatpush1.xpose.msra.mxu0 0.0
        %809 = vmatprep.subr.mxu0 0.0
        %810 = vmatpush1.xpose.msra.mxu0 0.0
        %811 = vmatprep.subr.mxu0 0.0
        %812 = vmatpush1.xpose.msra.mxu0 0.0
        %813 = vmatprep.subr.mxu0 0.0
        %814 = vmatpush1.xpose.msra.mxu0 0.0
        %815 = vmatprep.subr.mxu0 0.0
        %816 = vmatpush1.xpose.msra.mxu0 0.0
        %817 = vmatprep.subr.mxu0 0.0
        %818 = vmatpush1.xpose.msra.mxu0 0.0
        %819 = vmatprep.subr.mxu0 0.0
        %820 = vmatpush1.xpose.msra.mxu0 0.0
        %821 = vmatprep.subr.mxu0 0.0
        %822 = vmatpush1.xpose.msra.mxu0 0.0
        %823 = vmatprep.subr.mxu0 0.0
        %824 = vmatpush1.xpose.msra.mxu0 0.0
        %825 = vmatprep.subr.mxu0 0.0
        %826 = vmatpush1.xpose.msra.mxu0 0.0
        %827 = vmatprep.subr.mxu0 0.0
        %828 = vmatpush1.xpose.msra.mxu0 0.0
        %829 = vmatprep.subr.mxu0 0.0
        %830 = vmatpush1.xpose.msra.mxu0 0.0
        %831 = vmatprep.subr.mxu0 0.0
        %832 = vmatpush1.xpose.msra.mxu0 0.0
        %833 = vmatprep.subr.mxu0 0.0
        %834 = vmatpush1.xpose.msra.mxu0 0.0
        %835 = vmatprep.subr.mxu0 0.0
        %836 = vmatpush1.xpose.msra.mxu0 0.0
        %837 = vmatprep.subr.mxu0 0.0
        %838 = vmatpush1.xpose.msra.mxu0 0.0
        %839 = vmatprep.subr.mxu0 0.0
        %840 = vmatpush1.xpose.msra.mxu0 0.0
        %841 = vmatprep.subr.mxu0 0.0
        %842 = vmatpush1.xpose.msra.mxu0 0.0
        %843 = vmatprep.subr.mxu0 0.0
        %844 = vmatpush1.xpose.msra.mxu0 0.0
        %845 = vmatprep.subr.mxu0 0.0
        %846 = vmatpush1.xpose.msra.mxu0 0.0
        %847 = vmatprep.subr.mxu0 0.0
        %848 = vmatpush1.xpose.msra.mxu0 0.0
        %849 = vmatprep.subr.mxu0 0.0
        %850 = vmatpush1.xpose.msra.mxu0 0.0
        %851 = vmatprep.subr.mxu0 0.0
        %852 = vmatpush1.xpose.msra.mxu0 0.0
        %853 = vmatprep.subr.mxu0 0.0
        %854 = vmatpush1.xpose.msra.mxu0 0.0
        %855 = vmatprep.subr.mxu0 0.0
        %856 = vmatpush1.xpose.msra.mxu0 0.0
        %857 = vmatprep.subr.mxu0 0.0
        %858 = vmatpush1.xpose.msra.mxu0 0.0
        %859 = vmatprep.subr.mxu0 0.0
        %860 = vmatpush1.xpose.msra.mxu0 0.0
        %861 = vmatprep.subr.mxu0 0.0
        %862 = vmatpush1.xpose.msra.mxu0 0.0
        %863 = vmatprep.subr.mxu0 0.0
        %864 = vmatpush1.xpose.msra.mxu0 0.0
        %865 = vmatprep.mubr.f32.mxu0 0.0
        %866 = vmatmul.mubr.f32.gmra.mrb[0].mxu0 %v793
        %v867 = vpop.f32.mrb[0].mxu0
        %v868 = vadd.f32 0.0, %v867
        %v869 = vpop.f32.mrb[0].mxu0
        %870 = vmatprep.mubr.f32.mxu0 0.0
        %871 = vmatmul.mubr.f32.gmra.mrb[0].mxu0 %v795
        %v872 = vpop.f32.mrb[0].mxu0
        %v873 = vadd.f32 0.0, %v872
        %v874 = vpop.f32.mrb[0].mxu0
        %875 = vdwg.mxu0
        %v876 = vsel %vm391, %v868, -inf
        %877 = vmax.xlane.f32.xlu0 %v876
        %v878 = vpop.xlane.xlu0 %877
        %v879 = vsel %vm391, %v873, -inf
        %880 = vmax.xlane.f32.xlu0 %v879
        %v881 = vpop.xlane.xlu0 %880
        %v882 = vsub.f32 %v868, %v878
        %v883 = vsub.f32 %v873, %v881
        %v884 = vmul.f32 %v882, 1.442695
        %v885 = vpow.pop %v884
        %v886 = vmul.f32 %v883, 1.442695
        %v887 = vpow.pop %v886
        %v888 = vsel %vm391, %v885, 0.0
        %889 = vadd.xlane.f32.xlu0 %v888
        %v890 = vpop.xlane.xlu0 %889
        %v891 = vsel %vm391, %v887, 0.0
        %892 = vadd.xlane.f32.xlu0 %v891
        %v893 = vpop.xlane.xlu0 %892
        %v894 = vrcp.pop %v890
        %v895 = vrcp.pop %v893
        %v896 = vmul.f32 %v885, %v894
        %v897 = vmul.f32 %v887, %v895
        %s898 = scalar_lea.vmem %s275, 32 [#allocation8]
        %899 = vst.msk [vmem:[%s898] sm:$0xff] %vm391, %v896
        %900 = vst.msk [vmem:[%s898 + $0x8] sm:$0xff] %vm391, %v897
        %901 = vrot.lane.b32.xlu0 %v377, 96
        %v902 = vpop.permute.xlu0 %901
        %903 = vrot.lane.b32.xlu0 %v383, 96
        %v904 = vpop.permute.xlu0 %903
        %v908 = vsel %vm391, %v896, 0
        %v911 = vsel %vm391, %v897, 0
        %913 = vmatprep.subr.mxu0 0.0
        %914 = vmatpush1.msra.mxu0 %v902
        %915 = vmatprep.subr.mxu0 0.0
        %916 = vmatpush1.msra.mxu0 %v904
        %917 = vmatprep.subr.mxu0 0.0
        %918 = vmatpush1.msra.mxu0 0.0
        %919 = vmatprep.subr.mxu0 0.0
        %920 = vmatpush1.msra.mxu0 0.0
        %921 = vmatprep.subr.mxu0 0.0
        %922 = vmatpush1.msra.mxu0 0.0
        %923 = vmatprep.subr.mxu0 0.0
        %924 = vmatpush1.msra.mxu0 0.0
        %925 = vmatprep.subr.mxu0 0.0
        %926 = vmatpush1.msra.mxu0 0.0
        %927 = vmatprep.subr.mxu0 0.0
        %928 = vmatpush1.msra.mxu0 0.0
        %929 = vmatprep.subr.mxu0 0.0
        %930 = vmatpush1.msra.mxu0 0.0
        %931 = vmatprep.subr.mxu0 0.0
        %932 = vmatpush1.msra.mxu0 0.0
        %933 = vmatprep.subr.mxu0 0.0
        %934 = vmatpush1.msra.mxu0 0.0
        %935 = vmatprep.subr.mxu0 0.0
        %936 = vmatpush1.msra.mxu0 0.0
        %937 = vmatprep.subr.mxu0 0.0
        %938 = vmatpush1.msra.mxu0 0.0
        %939 = vmatprep.subr.mxu0 0.0
        %940 = vmatpush1.msra.mxu0 0.0
        %941 = vmatprep.subr.mxu0 0.0
        %942 = vmatpush1.msra.mxu0 0.0
        %943 = vmatprep.subr.mxu0 0.0
        %944 = vmatpush1.msra.mxu0 0.0
        %945 = vmatprep.subr.mxu0 0.0
        %946 = vmatpush1.msra.mxu0 0.0
        %947 = vmatprep.subr.mxu0 0.0
        %948 = vmatpush1.msra.mxu0 0.0
        %949 = vmatprep.subr.mxu0 0.0
        %950 = vmatpush1.msra.mxu0 0.0
        %951 = vmatprep.subr.mxu0 0.0
        %952 = vmatpush1.msra.mxu0 0.0
        %953 = vmatprep.subr.mxu0 0.0
        %954 = vmatpush1.msra.mxu0 0.0
        %955 = vmatprep.subr.mxu0 0.0
        %956 = vmatpush1.msra.mxu0 0.0
        %957 = vmatprep.subr.mxu0 0.0
        %958 = vmatpush1.msra.mxu0 0.0
        %959 = vmatprep.subr.mxu0 0.0
        %960 = vmatpush1.msra.mxu0 0.0
        %961 = vmatprep.subr.mxu0 0.0
        %962 = vmatpush1.msra.mxu0 0.0
        %963 = vmatprep.subr.mxu0 0.0
        %964 = vmatpush1.msra.mxu0 0.0
        %965 = vmatprep.subr.mxu0 0.0
        %966 = vmatpush1.msra.mxu0 0.0
        %967 = vmatprep.subr.mxu0 0.0
        %968 = vmatpush1.msra.mxu0 0.0
        %969 = vmatprep.subr.mxu0 0.0
        %970 = vmatpush1.msra.mxu0 0.0
        %971 = vmatprep.subr.mxu0 0.0
        %972 = vmatpush1.msra.mxu0 0.0
        %973 = vmatprep.subr.mxu0 0.0
        %974 = vmatpush1.msra.mxu0 0.0
        %975 = vmatprep.subr.mxu0 0.0
        %976 = vmatpush1.msra.mxu0 0.0
        %977 = vmatprep.mubr.f32.mxu0 0.0
        %978 = vmatmul.mubr.f32.gmra.mrb[0].mxu0 %v908
        %v979 = vpop.f32.mrb[0].mxu0
        %v980 = vadd.f32 0.0, %v979
        %v981 = vpop.f32.mrb[0].mxu0
        %982 = vmatprep.mubr.f32.mxu0 0.0
        %983 = vmatmul.mubr.f32.gmra.mrb[0].mxu0 %v911
        %v984 = vpop.f32.mrb[0].mxu0
        %v985 = vadd.f32 0.0, %v984
        %v986 = vpop.f32.mrb[0].mxu0
        %987 = vdwg.mxu0
        %988 = vrot.lane.b32.xlu0 %v375, 80
        %v989 = vpop.permute.xlu0 %988
        %990 = vrot.lane.b32.xlu0 %v381, 80
        %v991 = vpop.permute.xlu0 %990
        %992 = vrot.lane.b32.xlu0 %v375, 16
        %v993 = vpop.permute.xlu0 %992
        %994 = vrot.lane.b32.xlu0 %v381, 16
        %v995 = vpop.permute.xlu0 %994
        %v996 = vsel %vm391, %v989, 0
        %v998 = vsel %vm391, %v991, 0
        %v1000 = vsel %vm391, %v993, 0
        %v1002 = vsel %vm391, %v995, 0
        %1004 = vmatprep.subr.mxu0 0.0
        %1005 = vmatpush1.xpose.msra.mxu0 %v1000
        %1006 = vmatprep.subr.mxu0 0.0
        %1007 = vmatpush1.xpose.msra.mxu0 %v1002
        %1008 = vmatprep.subr.mxu0 0.0
        %1009 = vmatpush1.xpose.msra.mxu0 0.0
        %1010 = vmatprep.subr.mxu0 0.0
        %1011 = vmatpush1.xpose.msra.mxu0 0.0
        %1012 = vmatprep.subr.mxu0 0.0
        %1013 = vmatpush1.xpose.msra.mxu0 0.0
        %1014 = vmatprep.subr.mxu0 0.0
        %1015 = vmatpush1.xpose.msra.mxu0 0.0
        %1016 = vmatprep.subr.mxu0 0.0
        %1017 = vmatpush1.xpose.msra.mxu0 0.0
        %1018 = vmatprep.subr.mxu0 0.0
        %1019 = vmatpush1.xpose.msra.mxu0 0.0
        %1020 = vmatprep.subr.mxu0 0.0
        %1021 = vmatpush1.xpose.msra.mxu0 0.0
        %1022 = vmatprep.subr.mxu0 0.0
        %1023 = vmatpush1.xpose.msra.mxu0 0.0
        %1024 = vmatprep.subr.mxu0 0.0
        %1025 = vmatpush1.xpose.msra.mxu0 0.0
        %1026 = vmatprep.subr.mxu0 0.0
        %1027 = vmatpush1.xpose.msra.mxu0 0.0
        %1028 = vmatprep.subr.mxu0 0.0
        %1029 = vmatpush1.xpose.msra.mxu0 0.0
        %1030 = vmatprep.subr.mxu0 0.0
        %1031 = vmatpush1.xpose.msra.mxu0 0.0
        %1032 = vmatprep.subr.mxu0 0.0
        %1033 = vmatpush1.xpose.msra.mxu0 0.0
        %1034 = vmatprep.subr.mxu0 0.0
        %1035 = vmatpush1.xpose.msra.mxu0 0.0
        %1036 = vmatprep.subr.mxu0 0.0
        %1037 = vmatpush1.xpose.msra.mxu0 0.0
        %1038 = vmatprep.subr.mxu0 0.0
        %1039 = vmatpush1.xpose.msra.mxu0 0.0
        %1040 = vmatprep.subr.mxu0 0.0
        %1041 = vmatpush1.xpose.msra.mxu0 0.0
        %1042 = vmatprep.subr.mxu0 0.0
        %1043 = vmatpush1.xpose.msra.mxu0 0.0
        %1044 = vmatprep.subr.mxu0 0.0
        %1045 = vmatpush1.xpose.msra.mxu0 0.0
        %1046 = vmatprep.subr.mxu0 0.0
        %1047 = vmatpush1.xpose.msra.mxu0 0.0
        %1048 = vmatprep.subr.mxu0 0.0
        %1049 = vmatpush1.xpose.msra.mxu0 0.0
        %1050 = vmatprep.subr.mxu0 0.0
        %1051 = vmatpush1.xpose.msra.mxu0 0.0
        %1052 = vmatprep.subr.mxu0 0.0
        %1053 = vmatpush1.xpose.msra.mxu0 0.0
        %1054 = vmatprep.subr.mxu0 0.0
        %1055 = vmatpush1.xpose.msra.mxu0 0.0
        %1056 = vmatprep.subr.mxu0 0.0
        %1057 = vmatpush1.xpose.msra.mxu0 0.0
        %1058 = vmatprep.subr.mxu0 0.0
        %1059 = vmatpush1.xpose.msra.mxu0 0.0
        %1060 = vmatprep.subr.mxu0 0.0
        %1061 = vmatpush1.xpose.msra.mxu0 0.0
        %1062 = vmatprep.subr.mxu0 0.0
        %1063 = vmatpush1.xpose.msra.mxu0 0.0
        %1064 = vmatprep.subr.mxu0 0.0
        %1065 = vmatpush1.xpose.msra.mxu0 0.0
        %1066 = vmatprep.subr.mxu0 0.0
        %1067 = vmatpush1.xpose.msra.mxu0 0.0
        %1068 = vmatprep.mubr.f32.mxu0 0.0
        %1069 = vmatmul.mubr.f32.gmra.mrb[0].mxu0 %v996
        %v1070 = vpop.f32.mrb[0].mxu0
        %v1071 = vadd.f32 0.0, %v1070
        %v1072 = vpop.f32.mrb[0].mxu0
        %1073 = vmatprep.mubr.f32.mxu0 0.0
        %1074 = vmatmul.mubr.f32.gmra.mrb[0].mxu0 %v998
        %v1075 = vpop.f32.mrb[0].mxu0
        %v1076 = vadd.f32 0.0, %v1075
        %v1077 = vpop.f32.mrb[0].mxu0
        %1078 = vdwg.mxu0
        %v1079 = vsel %vm391, %v1071, -inf
        %1080 = vmax.xlane.f32.xlu0 %v1079
        %v1081 = vpop.xlane.xlu0 %1080
        %v1082 = vsel %vm391, %v1076, -inf
        %1083 = vmax.xlane.f32.xlu0 %v1082
        %v1084 = vpop.xlane.xlu0 %1083
        %v1085 = vsub.f32 %v1071, %v1081
        %v1086 = vsub.f32 %v1076, %v1084
        %v1087 = vmul.f32 %v1085, 1.442695
        %v1088 = vpow.pop %v1087
        %v1089 = vmul.f32 %v1086, 1.442695
        %v1090 = vpow.pop %v1089
        %v1091 = vsel %vm391, %v1088, 0.0
        %1092 = vadd.xlane.f32.xlu0 %v1091
        %v1093 = vpop.xlane.xlu0 %1092
        %v1094 = vsel %vm391, %v1090, 0.0
        %1095 = vadd.xlane.f32.xlu0 %v1094
        %v1096 = vpop.xlane.xlu0 %1095
        %v1097 = vrcp.pop %v1093
        %v1098 = vrcp.pop %v1096
        %v1099 = vmul.f32 %v1088, %v1097
        %v1100 = vmul.f32 %v1090, %v1098
        %s1101 = scalar_lea.vmem %s275, 48 [#allocation8]
        %1102 = vst.msk [vmem:[%s1101] sm:$0xff] %vm391, %v1099
        %1103 = vst.msk [vmem:[%s1101 + $0x8] sm:$0xff] %vm391, %v1100
        %1104 = vrot.lane.b32.xlu0 %v377, 80
        %v1105 = vpop.permute.xlu0 %1104
        %1106 = vrot.lane.b32.xlu0 %v383, 80
        %v1107 = vpop.permute.xlu0 %1106
        %v1111 = vsel %vm391, %v1099, 0
        %v1114 = vsel %vm391, %v1100, 0
        %1116 = vmatprep.subr.mxu0 0.0
        %1117 = vmatpush1.msra.mxu0 %v1105
        %1118 = vmatprep.subr.mxu0 0.0
        %1119 = vmatpush1.msra.mxu0 %v1107
        %1120 = vmatprep.subr.mxu0 0.0
        %1121 = vmatpush1.msra.mxu0 0.0
        %1122 = vmatprep.subr.mxu0 0.0
        %1123 = vmatpush1.msra.mxu0 0.0
        %1124 = vmatprep.subr.mxu0 0.0
        %1125 = vmatpush1.msra.mxu0 0.0
        %1126 = vmatprep.subr.mxu0 0.0
        %1127 = vmatpush1.msra.mxu0 0.0
        %1128 = vmatprep.subr.mxu0 0.0
        %1129 = vmatpush1.msra.mxu0 0.0
        %1130 = vmatprep.subr.mxu0 0.0
        %1131 = vmatpush1.msra.mxu0 0.0
        %1132 = vmatprep.subr.mxu0 0.0
        %1133 = vmatpush1.msra.mxu0 0.0
        %1134 = vmatprep.subr.mxu0 0.0
        %1135 = vmatpush1.msra.mxu0 0.0
        %1136 = vmatprep.subr.mxu0 0.0
        %1137 = vmatpush1.msra.mxu0 0.0
        %1138 = vmatprep.subr.mxu0 0.0
        %1139 = vmatpush1.msra.mxu0 0.0
        %1140 = vmatprep.subr.mxu0 0.0
        %1141 = vmatpush1.msra.mxu0 0.0
        %1142 = vmatprep.subr.mxu0 0.0
        %1143 = vmatpush1.msra.mxu0 0.0
        %1144 = vmatprep.subr.mxu0 0.0
        %1145 = vmatpush1.msra.mxu0 0.0
        %1146 = vmatprep.subr.mxu0 0.0
        %1147 = vmatpush1.msra.mxu0 0.0
        %1148 = vmatprep.subr.mxu0 0.0
        %1149 = vmatpush1.msra.mxu0 0.0
        %1150 = vmatprep.subr.mxu0 0.0
        %1151 = vmatpush1.msra.mxu0 0.0
        %1152 = vmatprep.subr.mxu0 0.0
        %1153 = vmatpush1.msra.mxu0 0.0
        %1154 = vmatprep.subr.mxu0 0.0
        %1155 = vmatpush1.msra.mxu0 0.0
        %1156 = vmatprep.subr.mxu0 0.0
        %1157 = vmatpush1.msra.mxu0 0.0
        %1158 = vmatprep.subr.mxu0 0.0
        %1159 = vmatpush1.msra.mxu0 0.0
        %1160 = vmatprep.subr.mxu0 0.0
        %1161 = vmatpush1.msra.mxu0 0.0
        %1162 = vmatprep.subr.mxu0 0.0
        %1163 = vmatpush1.msra.mxu0 0.0
        %1164 = vmatprep.subr.mxu0 0.0
        %1165 = vmatpush1.msra.mxu0 0.0
        %1166 = vmatprep.subr.mxu0 0.0
        %1167 = vmatpush1.msra.mxu0 0.0
        %1168 = vmatprep.subr.mxu0 0.0
        %1169 = vmatpush1.msra.mxu0 0.0
        %1170 = vmatprep.subr.mxu0 0.0
        %1171 = vmatpush1.msra.mxu0 0.0
        %1172 = vmatprep.subr.mxu0 0.0
        %1173 = vmatpush1.msra.mxu0 0.0
        %1174 = vmatprep.subr.mxu0 0.0
        %1175 = vmatpush1.msra.mxu0 0.0
        %1176 = vmatprep.subr.mxu0 0.0
        %1177 = vmatpush1.msra.mxu0 0.0
        %1178 = vmatprep.subr.mxu0 0.0
        %1179 = vmatpush1.msra.mxu0 0.0
        %1180 = vmatprep.mubr.f32.mxu0 0.0
        %1181 = vmatmul.mubr.f32.gmra.mrb[0].mxu0 %v1111
        %v1182 = vpop.f32.mrb[0].mxu0
        %v1183 = vadd.f32 0.0, %v1182
        %v1184 = vpop.f32.mrb[0].mxu0
        %1185 = vmatprep.mubr.f32.mxu0 0.0
        %1186 = vmatmul.mubr.f32.gmra.mrb[0].mxu0 %v1114
        %v1187 = vpop.f32.mrb[0].mxu0
        %v1188 = vadd.f32 0.0, %v1187
        %v1189 = vpop.f32.mrb[0].mxu0
        %1190 = vdwg.mxu0
        %1193 = vrot.lane.b32.xlu0 %v777, 16
        %v1194 = vpop.permute.xlu0 %1193
        %1195 = vrot.lane.b32.xlu0 %v782, 16
        %v1196 = vpop.permute.xlu0 %1195
        %1201 = vrot.lane.b32.xlu0 %v980, 32
        %v1202 = vpop.permute.xlu0 %1201
        %1203 = vrot.lane.b32.xlu0 %v985, 32
        %v1204 = vpop.permute.xlu0 %1203
        %1209 = vrot.lane.b32.xlu0 %v1183, 48
        %v1210 = vpop.permute.xlu0 %1209
        %1211 = vrot.lane.b32.xlu0 %v1188, 48
        %v1212 = vpop.permute.xlu0 %1211
        %v1215 = vsel %vm391, %v572, %v1194
        %v1216 = vsel %vm391, %v577, %v1196
        %vm1217 = vcmask 261120
        %v1218 = vsel %vm1217, %v1215, %v1202
        %v1219 = vsel %vm1217, %v1216, %v1204
        %vm1220 = vcmask 392192
        %v1221 = vsel %vm1220, %v1218, %v1210
        %v1222 = vsel %vm1220, %v1219, %v1212
        %v1223 = vld [vmem:[#allocation7] sm:$0xff]
        %v1224 = vld [vmem:[#allocation7 + $0x8] sm:$0xff]
        %v1225 = vld [vmem:[#allocation7 + $0x10] sm:$0xff]
        %v1226 = vld [vmem:[#allocation7 + $0x18] sm:$0xff]
        %v1227 = vld [vmem:[#allocation7 + $0x20] sm:$0xff]
        %v1228 = vld [vmem:[#allocation7 + $0x28] sm:$0xff]
        %v1229 = vld [vmem:[#allocation7 + $0x30] sm:$0xff]
        %v1230 = vld [vmem:[#allocation7 + $0x38] sm:$0xff]
        %v1231 = vld [vmem:[%s3] sm:$0x1]
        %v1233 = vlaneseq
        %v1234 = vshrl.u32 %v1233, 7
        %v1235 = vsub.s32 0, %v1234
        %v1236 = vrot.slane %v1231, %v1235
        %v1239 = vsel %vm301, %v1221, 0
        %v1242 = vsel %vm301, %v1222, 0
        %1244 = vmatprep.subr.mxu0 0.0
        %1245 = vmatpush1.msra.mxu0 %v1223
        %1246 = vmatprep.subr.mxu0 0.0
        %1247 = vmatpush1.msra.mxu0 %v1224
        %1248 = vmatprep.subr.mxu0 0.0
        %1249 = vmatpush1.msra.mxu0 %v1225
        %1250 = vmatprep.subr.mxu0 0.0
        %1251 = vmatpush1.msra.mxu0 %v1226
        %1252 = vmatprep.subr.mxu0 0.0
        %1253 = vmatpush1.msra.mxu0 %v1227
        %1254 = vmatprep.subr.mxu0 0.0
        %1255 = vmatpush1.msra.mxu0 %v1228
        %1256 = vmatprep.subr.mxu0 0.0
        %1257 = vmatpush1.msra.mxu0 %v1229
        %1258 = vmatprep.subr.mxu0 0.0
        %1259 = vmatpush1.msra.mxu0 %v1230
        %1260 = vmatprep.subr.mxu0 0.0
        %1261 = vmatpush1.msra.mxu0 0.0
        %1262 = vmatprep.subr.mxu0 0.0
        %1263 = vmatpush1.msra.mxu0 0.0
        %1264 = vmatprep.subr.mxu0 0.0
        %1265 = vmatpush1.msra.mxu0 0.0
        %1266 = vmatprep.subr.mxu0 0.0
        %1267 = vmatpush1.msra.mxu0 0.0
        %1268 = vmatprep.subr.mxu0 0.0
        %1269 = vmatpush1.msra.mxu0 0.0
        %1270 = vmatprep.subr.mxu0 0.0
        %1271 = vmatpush1.msra.mxu0 0.0
        %1272 = vmatprep.subr.mxu0 0.0
        %1273 = vmatpush1.msra.mxu0 0.0
        %1274 = vmatprep.subr.mxu0 0.0
        %1275 = vmatpush1.msra.mxu0 0.0
        %1276 = vmatprep.subr.mxu0 0.0
        %1277 = vmatpush1.msra.mxu0 0.0
        %1278 = vmatprep.subr.mxu0 0.0
        %1279 = vmatpush1.msra.mxu0 0.0
        %1280 = vmatprep.subr.mxu0 0.0
        %1281 = vmatpush1.msra.mxu0 0.0
        %1282 = vmatprep.subr.mxu0 0.0
        %1283 = vmatpush1.msra.mxu0 0.0
        %1284 = vmatprep.subr.mxu0 0.0
        %1285 = vmatpush1.msra.mxu0 0.0
        %1286 = vmatprep.subr.mxu0 0.0
        %1287 = vmatpush1.msra.mxu0 0.0
        %1288 = vmatprep.subr.mxu0 0.0
        %1289 = vmatpush1.msra.mxu0 0.0
        %1290 = vmatprep.subr.mxu0 0.0
        %1291 = vmatpush1.msra.mxu0 0.0
        %1292 = vmatprep.subr.mxu0 0.0
        %1293 = vmatpush1.msra.mxu0 0.0
        %1294 = vmatprep.subr.mxu0 0.0
        %1295 = vmatpush1.msra.mxu0 0.0
        %1296 = vmatprep.subr.mxu0 0.0
        %1297 = vmatpush1.msra.mxu0 0.0
        %1298 = vmatprep.subr.mxu0 0.0
        %1299 = vmatpush1.msra.mxu0 0.0
        %1300 = vmatprep.subr.mxu0 0.0
        %1301 = vmatpush1.msra.mxu0 0.0
        %1302 = vmatprep.subr.mxu0 0.0
        %1303 = vmatpush1.msra.mxu0 0.0
        %1304 = vmatprep.subr.mxu0 0.0
        %1305 = vmatpush1.msra.mxu0 0.0
        %1306 = vmatprep.subr.mxu0 0.0
        %1307 = vmatpush1.msra.mxu0 0.0
        %1308 = vmatprep.mubr.f32.mxu0 0.0
        %1309 = vmatmul.mubr.f32.gmra.mrb[0].mxu0 %v1239
        %v1310 = vpop.f32.mrb[0].mxu0
        %v1311 = vadd.f32 %v1236, %v1310
        %v1312 = vpop.f32.mrb[0].mxu0
        %1313 = vmatprep.mubr.f32.mxu0 0.0
        %1314 = vmatmul.mubr.f32.gmra.mrb[0].mxu0 %v1242
        %v1315 = vpop.f32.mrb[0].mxu0
        %v1316 = vadd.f32 %v1236, %v1315
        %v1317 = vpop.f32.mrb[0].mxu0
        %1318 = vdwg.mxu0
        %1319 = vst.msk [vmem:[%s282] sm:$0xff] %vm301, %v1311
        %1320 = vst.msk [vmem:[%s282 + $0x8] sm:$0xff] %vm301, %v1316
        %s1321 = sand.u32 %s124, 1
        %s1322 = scalar_lea.sflag [#allocation4], %s1321
        %s1323 = sand.u32 %s124, 1
        %s1324 = smul.addr %s1323, 64
        %s1325 = scalar_lea.vmem [#allocation8], %s1324
        %s1326 = sand.u32 %s150, 1
        %s1327 = scalar_lea.sflag [#allocation10], %s1326
        %s1328 = sand.u32 %s150, 1
        %s1329 = smul.addr %s1328, 16
        %s1330 = scalar_lea.vmem [#allocation9], %s1329
        // Predicated region
        $region49: #{tpu_custom_call.1} parent=35 // pred_check
          %p1331 = pneg %p134
        $region50: #{tpu_custom_call.1} parent=35 // pred_check_branch
          %1333 = sbr.rel (%p1331) target = $region52
        $region51: #{tpu_custom_call.1} parent=35 // pred_region
          %s1335 = ssub.s32 1024, 1024
          %1336 = vsyncadd %s1322, %s1335
          %s1337 = smul.addr %s27, 8
          %s1338 = smul.addr %s1337, 128
          %s1339 = scalar_lea.hbm %s4, %s1338
          %s1340 = sshll.u32 %s1325, 4
          %s1341 = int_to_ptr.vmem [resolvable:$true] %s1340
          %1346 = dma.vmem_to_hbm [thread:$0]  %s1341, 1024, %s1339, %s1322, 128, 128, 8
        $region52: #{tpu_custom_call.1} parent=35 // pred_fallthru
          _
        // Predicated region
        $region53: #{tpu_custom_call.1} parent=35 // pred_check
          %p1347 = pneg %p160
        $region54: #{tpu_custom_call.1} parent=35 // pred_check_branch
          %1349 = sbr.rel (%p1347) target = $region56
        $region55: #{tpu_custom_call.1} parent=35 // pred_region
          %s1351 = ssub.s32 256, 256
          %1352 = vsyncadd %s1327, %s1351
          %s1353 = smul.addr %s27, 2
          %s1354 = smul.addr %s1353, 128
          %s1355 = scalar_lea.hbm %s5, %s1354
          %s1356 = sshll.u32 %s1330, 4
          %s1357 = int_to_ptr.vmem [resolvable:$true] %s1356
          %1362 = dma.vmem_to_hbm [thread:$0]  %s1357, 256, %s1355, %s1327, 128, 128, 8
        $region56: #{tpu_custom_call.1} parent=35 // pred_fallthru
          _
      $region36: #{tpu_custom_call.1} parent=5 // pred_fallthru
        _
      %p1363 = scmp.le.s32.totalorder 2, %s22
      // Predicated region
      $region57: #{tpu_custom_call.1} parent=5 // pred_check
        %p1364 = pneg %p1363
      $region58: #{tpu_custom_call.1} parent=5 // pred_check_branch
        %1366 = sbr.rel (%p1364) target = $region60
      $region59: #{tpu_custom_call.1} parent=5 // pred_region
        %s1367 = ssub.s32 %s22, 2
        // Predicated region
        $region61: #{tpu_custom_call.1} parent=59 // pred_check
          %p1368 = pneg %p140
        $region62: #{tpu_custom_call.1} parent=59 // pred_check_branch
          %1370 = sbr.rel (%p1368) target = $region64
        $region63: #{tpu_custom_call.1} parent=59 // pred_region
          %s1371 = sand.u32 %s125, 1
          %s1372 = scalar_lea.sflag [#allocation4], %s1371
          %s1373 = sand.u32 %s125, 1
          %s1374 = smul.addr %s1373, 64
          %s1375 = scalar_lea.vmem [#allocation8], %s1374
          %1376 = dma.done %s1372, 1024
        $region64: #{tpu_custom_call.1} parent=59 // pred_fallthru
          _
        // Predicated region
        $region65: #{tpu_custom_call.1} parent=59 // pred_check
          %p1377 = pneg %p166
        $region66: #{tpu_custom_call.1} parent=59 // pred_check_branch
          %1379 = sbr.rel (%p1377) target = $region68
        $region67: #{tpu_custom_call.1} parent=59 // pred_region
          %s1380 = sand.u32 %s151, 1
          %s1381 = scalar_lea.sflag [#allocation10], %s1380
          %s1382 = sand.u32 %s151, 1
          %s1383 = smul.addr %s1382, 16
          %s1384 = scalar_lea.vmem [#allocation9], %s1383
          %1385 = dma.done %s1381, 256
        $region68: #{tpu_custom_call.1} parent=59 // pred_fallthru
          _
      $region60: #{tpu_custom_call.1} parent=5 // pred_fallthru
        _
    $region6: #{tpu_custom_call.1} parent=1 // loop_footer
      %s26 = sadd.s32 1, %s22
    $region7: #{tpu_custom_call.1} parent=1 // loop_footer_branch
      %21 = sbr.rel target = $region3
    $region8: #{tpu_custom_call.1} parent=1 // loop_exit
      _
    %1386 = vsyncpa [#allocation3], 1
    %s1387 = scalar_lea.sflag [#allocation3], 1
    %1388 = vsyncpa %s1387, 1
    %1389 = vsyncpa [#allocation6], 1
    %1390 = vsyncpa [#allocation4], 1
    %s1391 = scalar_lea.sflag [#allocation4], 1
    %1392 = vsyncpa %s1391, 1
    %1393 = vsyncpa [#allocation10], 1
    %s1394 = scalar_lea.sflag [#allocation10], 1
    %1395 = vsyncpa %s1394, 1

</llo_original>
